<compile_context>
chip_gen: v5e
topology: v5e:2x2
jax: 0.10.0
libtpu: 0.0.40
codegen_flags: <defaults>
</compile_context>

<pallas_src>
import numpy as np
import jax
import jax.numpy as jnp
from jax.experimental import pallas as pl
from jax.experimental.pallas import tpu as pltpu


# ----------------------------------------------------------------------------
# Fused kernel: conv1 -> (+bn1 shift) -> relu -> conv2 -> (+bn2 shift) -> +residual -> relu
# One grid step == B NHWC images, resident in VMEM. BN scales are pre-folded into weights.
# ----------------------------------------------------------------------------
def basic_block_kernel(x_ref, w1_ref, b1_ref, w2_ref, b2_ref, o_ref):
    B, H, W, Cin = x_ref.shape
    Cout = o_ref.shape[-1]

    x = x_ref[...]                                             # (B, H, W, Cin), f32

    def conv3x3(xb, w):
        """3x3 'SAME' conv as 3 accumulating K=3*C matmuls (one per kernel row kh)."""
        C = xb.shape[-1]
        # In-kernel zero halo, built directly in bf16 (no f32 padded slab).
        zrow = jnp.zeros((B, 1, W, C), jnp.bfloat16)
        zcol = jnp.zeros((B, H + 2, 1, C), jnp.bfloat16)
        xp = jnp.concatenate([zrow, xb, zrow], axis=1)         # (B, H+2, W,   C)
        xp = jnp.concatenate([zcol, xp, zcol], axis=2)         # (B, H+2, W+2, C)

        acc = jnp.zeros((B * H * W, Cout), jnp.float32)
        for kh in range(3):                                    # static unroll (3 groups)
            # Tap group for this kernel row: concat over kw -> (B, H, W, 3*C).
            taps = jnp.concatenate(
                [xp[:, kh:kh + H, kw:kw + W, :] for kw in range(3)], axis=-1)
            acc = acc + jnp.dot(taps.reshape(B * H * W, 3 * C), w[kh],
                                preferred_element_type=jnp.float32)
        return acc                                             # (B*H*W, Cout), f32

    # ---- conv1 (BN1 scale folded into weights) -> + shift -> relu ----
    y1 = conv3x3(x.astype(jnp.bfloat16), w1_ref[...]) + b1_ref[...]
    y1 = jnp.maximum(y1, 0.0)
    y1 = y1.reshape(B, H, W, Cout).astype(jnp.bfloat16)        # single bf16 cast for conv2

    # ---- conv2 (BN2 scale folded) -> + shift -> +residual -> relu ----
    y2 = conv3x3(y1, w2_ref[...]) + b2_ref[...]
    out = jnp.maximum(y2 + x.reshape(B * H * W, Cin), 0.0)     # identity shortcut, f32
    o_ref[...] = out.reshape(B, H, W, Cout)


# ----------------------------------------------------------------------------
# Generation-aware tiling helpers (plain Python, wrapper side).
# ----------------------------------------------------------------------------
def _vmem_limit_bytes():
    """~3/4 of physical VMEM, capped at 100 MB (v7x: ~48 MB; v5e/v6e: ~96 MB)."""
    try:
        cap = pltpu.get_tpu_info().vmem_capacity_bytes
    except Exception:
        cap = None
    if not cap:
        cap = 64 * 1024 * 1024          # conservative fallback (v7x-sized VMEM)
    return int(min((int(cap) * 3) // 4, 100 * 1024 * 1024))


def _choose_block_batch(N, H, W, C, vmem_limit):
    """Images per grid step, sized to the VMEM budget (lane/sublane padding included)."""
    cp = -(-C // 128) * 128              # channel dim padded to the 128-lane tile
    cp3 = -(-(3 * C) // 128) * 128
    wp = -(-W // 8) * 8
    wpp = -(-(W + 2) // 8) * 8
    img_f32 = H * wp * cp * 4
    img_bf16 = H * wp * cp * 2
    pad_bf16 = (H + 2) * wpp * cp * 2
    taps_bf16 = H * wp * cp3 * 2
    per_img = (4 * img_f32               # double-buffered input + output blocks
               + 3 * img_f32             # x value, f32 accumulator, y1/out values
               + 2 * img_bf16            # bf16 casts of x and y1
               + pad_bf16 + taps_bf16)   # padded slab + live tap group
    B = max(1, int(vmem_limit * 0.6) // max(per_img, 1))
    B = min(B, max(1, N // 2))           # keep grid >= 2 so both v7x TCs stay busy
    while N % B:                         # B must divide N
        B -= 1
    return B


# ----------------------------------------------------------------------------
# Wrapper: parameter folding + layout plumbing (plain JAX glue).
# ----------------------------------------------------------------------------
def basic_block_forward(x_nchw, params, eps=1e-5):
    x = jnp.transpose(x_nchw, (0, 2, 3, 1)).astype(jnp.float32)   # NCHW -> NHWC
    N, H, W, Cin = x.shape

    w1_oihw = params["conv1_w"]                                   # (Cout, Cin, 3, 3)
    w2_oihw = params["conv2_w"]
    Cout = w1_oihw.shape[0]
    assert Cout == Cin, "identity-shortcut BasicBlock requires inplanes == planes"

    def fold(w_oihw, gamma, beta, mean, var):
        # Fold the BN scale into the conv weights: all math in f32, one bf16 cast.
        scale = gamma / jnp.sqrt(var + eps)
        shift = (beta - mean * scale).reshape(1, -1).astype(jnp.float32)
        w_hwio = jnp.transpose(w_oihw, (2, 3, 1, 0)).astype(jnp.float32)
        w_hwio = w_hwio * scale[None, None, None, :]
        ci = w_hwio.shape[2]
        # (kh, kw, ci, co) -> (kh, kw*ci, co): matches the kernel's per-kh tap ordering.
        w_k = w_hwio.reshape(3, 3 * ci, Cout).astype(jnp.bfloat16)
        return w_k, shift

    w1, b1 = fold(w1_oihw, params["bn1_gamma"], params["bn1_beta"],
                  params["bn1_mean"], params["bn1_var"])
    w2, b2 = fold(w2_oihw, params["bn2_gamma"], params["bn2_beta"],
                  params["bn2_mean"], params["bn2_var"])

    vmem_limit = _vmem_limit_bytes()
    B = _choose_block_batch(N, H, W, Cin, vmem_limit)

    img_in = pl.BlockSpec((B, H, W, Cin), lambda n: (n, 0, 0, 0))
    img_out = pl.BlockSpec((B, H, W, Cout), lambda n: (n, 0, 0, 0))

    def full_spec(shape):
        zeros = (0,) * len(shape)
        return pl.BlockSpec(shape, lambda n: zeros)

    out_nhwc = pl.pallas_call(
        basic_block_kernel,
        out_shape=jax.ShapeDtypeStruct((N, H, W, Cout), jnp.float32),
        grid=(N // B,),
        in_specs=[img_in,
                  full_spec(w1.shape), full_spec(b1.shape),
                  full_spec(w2.shape), full_spec(b2.shape)],
        out_specs=img_out,
        compiler_params=pltpu.CompilerParams(
            dimension_semantics=("parallel",),
            vmem_limit_bytes=vmem_limit),
    )(x, w1, b1, w2, b2)

    return jnp.transpose(out_nhwc, (0, 3, 1, 2))                  # NHWC -> NCHW


# ----------------------------------------------------------------------------
# Pure-JAX reference (f32 end-to-end) for a correctness check.
# ----------------------------------------------------------------------------
def reference_forward(x_nchw, params, eps=1e-5):
    x = jnp.transpose(x_nchw, (0, 2, 3, 1)).astype(jnp.float32)

    def conv(inp, w_oihw):
        w = jnp.transpose(w_oihw, (2, 3, 1, 0))                   # HWIO
        return jax.lax.conv_general_dilated(
            inp, w, window_strides=(1, 1), padding="SAME",
            dimension_numbers=("NHWC", "HWIO", "NHWC"))

    def bn(inp, g, b, m, v):
        return (inp - m) / jnp.sqrt(v + eps) * g + b

    out = conv(x, params["conv1_w"])
    out = bn(out, params["bn1_gamma"], params["bn1_beta"],
             params["bn1_mean"], params["bn1_var"])
    out = jax.nn.relu(out)
    out = conv(out, params["conv2_w"])
    out = bn(out, params["bn2_gamma"], params["bn2_beta"],
             params["bn2_mean"], params["bn2_var"])
    out = jax.nn.relu(out + x)
    return jnp.transpose(out, (0, 3, 1, 2))


def init_params(key, inplanes, planes):
    ks = jax.random.split(key, 10)
    return {
        "conv1_w": 0.1 * jax.random.normal(ks[0], (planes, inplanes, 3, 3), jnp.float32),
        "conv2_w": 0.1 * jax.random.normal(ks[1], (planes, planes, 3, 3), jnp.float32),
        "bn1_gamma": jax.random.uniform(ks[2], (planes,), jnp.float32, 0.5, 1.5),
        "bn1_beta":  0.1 * jax.random.normal(ks[3], (planes,), jnp.float32),
        "bn1_mean":  0.1 * jax.random.normal(ks[4], (planes,), jnp.float32),
        "bn1_var":   jax.random.uniform(ks[5], (planes,), jnp.float32, 0.5, 1.5),
        "bn2_gamma": jax.random.uniform(ks[6], (planes,), jnp.float32, 0.5, 1.5),
        "bn2_beta":  0.1 * jax.random.normal(ks[7], (planes,), jnp.float32),
        "bn2_mean":  0.1 * jax.random.normal(ks[8], (planes,), jnp.float32),
        "bn2_var":   jax.random.uniform(ks[9], (planes,), jnp.float32, 0.5, 1.5),
    }


if __name__ == "__main__":
    key = jax.random.PRNGKey(0)
    k_x, k_p = jax.random.split(key)

    N, C, H, W = 2, 4, 16, 16        # inplanes = planes = 4, stride = 1
    x = jax.random.normal(k_x, (N, C, H, W), jnp.float32)
    params = init_params(k_p, C, C)

    out = jax.block_until_ready(basic_block_forward(x, params))
    ref = jax.block_until_ready(reference_forward(x, params))

    # bf16 MXU operands (f32 accumulation) vs f32 reference -> relaxed tolerance.
    np.testing.assert_allclose(np.asarray(out), np.asarray(ref), rtol=3e-2, atol=3e-2)

    print("KERNEL_OK")
</pallas_src>

<mosaic_0001>
module attributes {stable_mosaic.version = 11 : i64} {
  func.func @basic_block_kernel(%arg0: i32, %arg1: memref<1x16x16x4xf32, #tpu.memory_space<vmem>>, %arg2: memref<3x12x4xbf16, #tpu.memory_space<vmem>>, %arg3: memref<1x4xf32, #tpu.memory_space<vmem>>, %arg4: memref<3x12x4xbf16, #tpu.memory_space<vmem>>, %arg5: memref<1x4xf32, #tpu.memory_space<vmem>>, %arg6: memref<1x16x16x4xf32, #tpu.memory_space<vmem>>) attributes {dimension_semantics = [#tpu.dimension_semantics<parallel>], iteration_bounds = array<i64: 2>, scalar_prefetch = 0 : i64, scratch_operands = 0 : i64, tpu.core_type = #tpu.core_type<tc>, window_params = [{transform_indices = @transform_0, window_bounds = array<i64: 1, 16, 16, 4>}, {pipeline_mode = #tpu.pipeline_mode<synchronous>, transform_indices = @transform_1, window_bounds = array<i64: 3, 12, 4>}, {pipeline_mode = #tpu.pipeline_mode<synchronous>, transform_indices = @transform_2, window_bounds = array<i64: 1, 4>}, {pipeline_mode = #tpu.pipeline_mode<synchronous>, transform_indices = @transform_3, window_bounds = array<i64: 3, 12, 4>}, {pipeline_mode = #tpu.pipeline_mode<synchronous>, transform_indices = @transform_4, window_bounds = array<i64: 1, 4>}, {transform_indices = @transform_5, window_bounds = array<i64: 1, 16, 16, 4>}]} {
    %c0 = arith.constant 0 : index
    %c0_0 = arith.constant 0 : index
    %c0_1 = arith.constant 0 : index
    %c0_2 = arith.constant 0 : index
    %0 = vector.load %arg1[%c0, %c0_0, %c0_1, %c0_2] : memref<1x16x16x4xf32, #tpu.memory_space<vmem>>, vector<1x16x16x4xf32>
    %1 = arith.truncf %0 : vector<1x16x16x4xf32> to vector<1x16x16x4xbf16>
    %c0_3 = arith.constant 0 : index
    %c0_4 = arith.constant 0 : index
    %c0_5 = arith.constant 0 : index
    %2 = vector.load %arg2[%c0_3, %c0_4, %c0_5] : memref<3x12x4xbf16, #tpu.memory_space<vmem>>, vector<3x12x4xbf16>
    %cst = arith.constant 0.000000e+00 : bf16
    %3 = vector.broadcast %cst : bf16 to vector<1x1x16x4xbf16>
    %cst_6 = arith.constant 0.000000e+00 : bf16
    %4 = vector.broadcast %cst_6 : bf16 to vector<1x18x1x4xbf16>
    %5 = tpu.concatenate %3, %1, %3 in 1 : vector<1x1x16x4xbf16>, vector<1x16x16x4xbf16>, vector<1x1x16x4xbf16> -> vector<1x18x16x4xbf16>
    %6 = tpu.concatenate %4, %5, %4 in 2 : vector<1x18x1x4xbf16>, vector<1x18x16x4xbf16>, vector<1x18x1x4xbf16> -> vector<1x18x18x4xbf16>
    %cst_7 = arith.constant 0.000000e+00 : f32
    %7 = vector.broadcast %cst_7 : f32 to vector<256x4xf32>
    %8 = vector.extract_strided_slice %6 {offsets = [0, 0, 0, 0], sizes = [1, 16, 16, 4], strides = [1, 1, 1, 1]} : vector<1x18x18x4xbf16> to vector<1x16x16x4xbf16>
    %9 = vector.extract_strided_slice %6 {offsets = [0, 0, 1, 0], sizes = [1, 16, 16, 4], strides = [1, 1, 1, 1]} : vector<1x18x18x4xbf16> to vector<1x16x16x4xbf16>
    %10 = vector.extract_strided_slice %6 {offsets = [0, 0, 2, 0], sizes = [1, 16, 16, 4], strides = [1, 1, 1, 1]} : vector<1x18x18x4xbf16> to vector<1x16x16x4xbf16>
    %11 = tpu.concatenate %8, %9, %10 in 3 : vector<1x16x16x4xbf16>, vector<1x16x16x4xbf16>, vector<1x16x16x4xbf16> -> vector<1x16x16x12xbf16>
    %12 = vector.shape_cast %11 : vector<1x16x16x12xbf16> to vector<256x12xbf16>
    %13 = vector.extract_strided_slice %2 {offsets = [0, 0, 0], sizes = [1, 12, 4], strides = [1, 1, 1]} : vector<3x12x4xbf16> to vector<1x12x4xbf16>
    %14 = vector.shape_cast %13 : vector<1x12x4xbf16> to vector<12x4xbf16>
    %cst_8 = arith.constant dense<0.000000e+00> : vector<256x4xf32>
    %15 = tpu.matmul %12, %14, %cst_8 {dimension_numbers = #tpu.dot_dimension_numbers<[1], [0], [0], [1], [0, 0, 1, 1], [], []>} : vector<256x12xbf16>, vector<12x4xbf16>, vector<256x4xf32> -> vector<256x4xf32>
    %16 = arith.addf %7, %15 : vector<256x4xf32>
    %17 = vector.extract_strided_slice %6 {offsets = [0, 1, 0, 0], sizes = [1, 16, 16, 4], strides = [1, 1, 1, 1]} : vector<1x18x18x4xbf16> to vector<1x16x16x4xbf16>
    %18 = vector.extract_strided_slice %6 {offsets = [0, 1, 1, 0], sizes = [1, 16, 16, 4], strides = [1, 1, 1, 1]} : vector<1x18x18x4xbf16> to vector<1x16x16x4xbf16>
    %19 = vector.extract_strided_slice %6 {offsets = [0, 1, 2, 0], sizes = [1, 16, 16, 4], strides = [1, 1, 1, 1]} : vector<1x18x18x4xbf16> to vector<1x16x16x4xbf16>
    %20 = tpu.concatenate %17, %18, %19 in 3 : vector<1x16x16x4xbf16>, vector<1x16x16x4xbf16>, vector<1x16x16x4xbf16> -> vector<1x16x16x12xbf16>
    %21 = vector.shape_cast %20 : vector<1x16x16x12xbf16> to vector<256x12xbf16>
    %22 = vector.extract_strided_slice %2 {offsets = [1, 0, 0], sizes = [1, 12, 4], strides = [1, 1, 1]} : vector<3x12x4xbf16> to vector<1x12x4xbf16>
    %23 = vector.shape_cast %22 : vector<1x12x4xbf16> to vector<12x4xbf16>
    %cst_9 = arith.constant dense<0.000000e+00> : vector<256x4xf32>
    %24 = tpu.matmul %21, %23, %cst_9 {dimension_numbers = #tpu.dot_dimension_numbers<[1], [0], [0], [1], [0, 0, 1, 1], [], []>} : vector<256x12xbf16>, vector<12x4xbf16>, vector<256x4xf32> -> vector<256x4xf32>
    %25 = arith.addf %16, %24 : vector<256x4xf32>
    %26 = vector.extract_strided_slice %6 {offsets = [0, 2, 0, 0], sizes = [1, 16, 16, 4], strides = [1, 1, 1, 1]} : vector<1x18x18x4xbf16> to vector<1x16x16x4xbf16>
    %27 = vector.extract_strided_slice %6 {offsets = [0, 2, 1, 0], sizes = [1, 16, 16, 4], strides = [1, 1, 1, 1]} : vector<1x18x18x4xbf16> to vector<1x16x16x4xbf16>
    %28 = vector.extract_strided_slice %6 {offsets = [0, 2, 2, 0], sizes = [1, 16, 16, 4], strides = [1, 1, 1, 1]} : vector<1x18x18x4xbf16> to vector<1x16x16x4xbf16>
    %29 = tpu.concatenate %26, %27, %28 in 3 : vector<1x16x16x4xbf16>, vector<1x16x16x4xbf16>, vector<1x16x16x4xbf16> -> vector<1x16x16x12xbf16>
    %30 = vector.shape_cast %29 : vector<1x16x16x12xbf16> to vector<256x12xbf16>
    %31 = vector.extract_strided_slice %2 {offsets = [2, 0, 0], sizes = [1, 12, 4], strides = [1, 1, 1]} : vector<3x12x4xbf16> to vector<1x12x4xbf16>
    %32 = vector.shape_cast %31 : vector<1x12x4xbf16> to vector<12x4xbf16>
    %cst_10 = arith.constant dense<0.000000e+00> : vector<256x4xf32>
    %33 = tpu.matmul %30, %32, %cst_10 {dimension_numbers = #tpu.dot_dimension_numbers<[1], [0], [0], [1], [0, 0, 1, 1], [], []>} : vector<256x12xbf16>, vector<12x4xbf16>, vector<256x4xf32> -> vector<256x4xf32>
    %34 = arith.addf %25, %33 : vector<256x4xf32>
    %c0_11 = arith.constant 0 : index
    %c0_12 = arith.constant 0 : index
    %35 = vector.load %arg3[%c0_11, %c0_12] : memref<1x4xf32, #tpu.memory_space<vmem>>, vector<1x4xf32>
    %36 = vector.broadcast %35 : vector<1x4xf32> to vector<256x4xf32>
    %37 = arith.addf %34, %36 : vector<256x4xf32>
    %cst_13 = arith.constant 0.000000e+00 : f32
    %38 = vector.broadcast %cst_13 : f32 to vector<256x4xf32>
    %39 = arith.maximumf %37, %38 : vector<256x4xf32>
    %40 = vector.shape_cast %39 : vector<256x4xf32> to vector<1x16x16x4xf32>
    %41 = arith.truncf %40 : vector<1x16x16x4xf32> to vector<1x16x16x4xbf16>
    %c0_14 = arith.constant 0 : index
    %c0_15 = arith.constant 0 : index
    %c0_16 = arith.constant 0 : index
    %42 = vector.load %arg4[%c0_14, %c0_15, %c0_16] : memref<3x12x4xbf16, #tpu.memory_space<vmem>>, vector<3x12x4xbf16>
    %cst_17 = arith.constant 0.000000e+00 : bf16
    %43 = vector.broadcast %cst_17 : bf16 to vector<1x1x16x4xbf16>
    %cst_18 = arith.constant 0.000000e+00 : bf16
    %44 = vector.broadcast %cst_18 : bf16 to vector<1x18x1x4xbf16>
    %45 = tpu.concatenate %43, %41, %43 in 1 : vector<1x1x16x4xbf16>, vector<1x16x16x4xbf16>, vector<1x1x16x4xbf16> -> vector<1x18x16x4xbf16>
    %46 = tpu.concatenate %44, %45, %44 in 2 : vector<1x18x1x4xbf16>, vector<1x18x16x4xbf16>, vector<1x18x1x4xbf16> -> vector<1x18x18x4xbf16>
    %cst_19 = arith.constant 0.000000e+00 : f32
    %47 = vector.broadcast %cst_19 : f32 to vector<256x4xf32>
    %48 = vector.extract_strided_slice %46 {offsets = [0, 0, 0, 0], sizes = [1, 16, 16, 4], strides = [1, 1, 1, 1]} : vector<1x18x18x4xbf16> to vector<1x16x16x4xbf16>
    %49 = vector.extract_strided_slice %46 {offsets = [0, 0, 1, 0], sizes = [1, 16, 16, 4], strides = [1, 1, 1, 1]} : vector<1x18x18x4xbf16> to vector<1x16x16x4xbf16>
    %50 = vector.extract_strided_slice %46 {offsets = [0, 0, 2, 0], sizes = [1, 16, 16, 4], strides = [1, 1, 1, 1]} : vector<1x18x18x4xbf16> to vector<1x16x16x4xbf16>
    %51 = tpu.concatenate %48, %49, %50 in 3 : vector<1x16x16x4xbf16>, vector<1x16x16x4xbf16>, vector<1x16x16x4xbf16> -> vector<1x16x16x12xbf16>
    %52 = vector.shape_cast %51 : vector<1x16x16x12xbf16> to vector<256x12xbf16>
    %53 = vector.extract_strided_slice %42 {offsets = [0, 0, 0], sizes = [1, 12, 4], strides = [1, 1, 1]} : vector<3x12x4xbf16> to vector<1x12x4xbf16>
    %54 = vector.shape_cast %53 : vector<1x12x4xbf16> to vector<12x4xbf16>
    %cst_20 = arith.constant dense<0.000000e+00> : vector<256x4xf32>
    %55 = tpu.matmul %52, %54, %cst_20 {dimension_numbers = #tpu.dot_dimension_numbers<[1], [0], [0], [1], [0, 0, 1, 1], [], []>} : vector<256x12xbf16>, vector<12x4xbf16>, vector<256x4xf32> -> vector<256x4xf32>
    %56 = arith.addf %47, %55 : vector<256x4xf32>
    %57 = vector.extract_strided_slice %46 {offsets = [0, 1, 0, 0], sizes = [1, 16, 16, 4], strides = [1, 1, 1, 1]} : vector<1x18x18x4xbf16> to vector<1x16x16x4xbf16>
    %58 = vector.extract_strided_slice %46 {offsets = [0, 1, 1, 0], sizes = [1, 16, 16, 4], strides = [1, 1, 1, 1]} : vector<1x18x18x4xbf16> to vector<1x16x16x4xbf16>
    %59 = vector.extract_strided_slice %46 {offsets = [0, 1, 2, 0], sizes = [1, 16, 16, 4], strides = [1, 1, 1, 1]} : vector<1x18x18x4xbf16> to vector<1x16x16x4xbf16>
    %60 = tpu.concatenate %57, %58, %59 in 3 : vector<1x16x16x4xbf16>, vector<1x16x16x4xbf16>, vector<1x16x16x4xbf16> -> vector<1x16x16x12xbf16>
    %61 = vector.shape_cast %60 : vector<1x16x16x12xbf16> to vector<256x12xbf16>
    %62 = vector.extract_strided_slice %42 {offsets = [1, 0, 0], sizes = [1, 12, 4], strides = [1, 1, 1]} : vector<3x12x4xbf16> to vector<1x12x4xbf16>
    %63 = vector.shape_cast %62 : vector<1x12x4xbf16> to vector<12x4xbf16>
    %cst_21 = arith.constant dense<0.000000e+00> : vector<256x4xf32>
    %64 = tpu.matmul %61, %63, %cst_21 {dimension_numbers = #tpu.dot_dimension_numbers<[1], [0], [0], [1], [0, 0, 1, 1], [], []>} : vector<256x12xbf16>, vector<12x4xbf16>, vector<256x4xf32> -> vector<256x4xf32>
    %65 = arith.addf %56, %64 : vector<256x4xf32>
    %66 = vector.extract_strided_slice %46 {offsets = [0, 2, 0, 0], sizes = [1, 16, 16, 4], strides = [1, 1, 1, 1]} : vector<1x18x18x4xbf16> to vector<1x16x16x4xbf16>
    %67 = vector.extract_strided_slice %46 {offsets = [0, 2, 1, 0], sizes = [1, 16, 16, 4], strides = [1, 1, 1, 1]} : vector<1x18x18x4xbf16> to vector<1x16x16x4xbf16>
    %68 = vector.extract_strided_slice %46 {offsets = [0, 2, 2, 0], sizes = [1, 16, 16, 4], strides = [1, 1, 1, 1]} : vector<1x18x18x4xbf16> to vector<1x16x16x4xbf16>
    %69 = tpu.concatenate %66, %67, %68 in 3 : vector<1x16x16x4xbf16>, vector<1x16x16x4xbf16>, vector<1x16x16x4xbf16> -> vector<1x16x16x12xbf16>
    %70 = vector.shape_cast %69 : vector<1x16x16x12xbf16> to vector<256x12xbf16>
    %71 = vector.extract_strided_slice %42 {offsets = [2, 0, 0], sizes = [1, 12, 4], strides = [1, 1, 1]} : vector<3x12x4xbf16> to vector<1x12x4xbf16>
    %72 = vector.shape_cast %71 : vector<1x12x4xbf16> to vector<12x4xbf16>
    %cst_22 = arith.constant dense<0.000000e+00> : vector<256x4xf32>
    %73 = tpu.matmul %70, %72, %cst_22 {dimension_numbers = #tpu.dot_dimension_numbers<[1], [0], [0], [1], [0, 0, 1, 1], [], []>} : vector<256x12xbf16>, vector<12x4xbf16>, vector<256x4xf32> -> vector<256x4xf32>
    %74 = arith.addf %65, %73 : vector<256x4xf32>
    %c0_23 = arith.constant 0 : index
    %c0_24 = arith.constant 0 : index
    %75 = vector.load %arg5[%c0_23, %c0_24] : memref<1x4xf32, #tpu.memory_space<vmem>>, vector<1x4xf32>
    %76 = vector.broadcast %75 : vector<1x4xf32> to vector<256x4xf32>
    %77 = arith.addf %74, %76 : vector<256x4xf32>
    %78 = vector.shape_cast %0 : vector<1x16x16x4xf32> to vector<256x4xf32>
    %79 = arith.addf %77, %78 : vector<256x4xf32>
    %cst_25 = arith.constant 0.000000e+00 : f32
    %80 = vector.broadcast %cst_25 : f32 to vector<256x4xf32>
    %81 = arith.maximumf %79, %80 : vector<256x4xf32>
    %82 = vector.shape_cast %81 : vector<256x4xf32> to vector<1x16x16x4xf32>
    %c0_26 = arith.constant 0 : index
    %c0_27 = arith.constant 0 : index
    %c0_28 = arith.constant 0 : index
    %c0_29 = arith.constant 0 : index
    %83 = vector.load %arg6[%c0_26, %c0_27, %c0_28, %c0_29] : memref<1x16x16x4xf32, #tpu.memory_space<vmem>>, vector<1x16x16x4xf32>
    tpu.vector_store %arg6[%c0_26, %c0_27, %c0_28, %c0_29], %82 {strides = array<i32>} : memref<1x16x16x4xf32, #tpu.memory_space<vmem>>, vector<1x16x16x4xf32>,
    return
  }
  func.func @transform_0(%arg0: i32) -> (i32, i32, i32, i32) {
    %c0_i32 = arith.constant 0 : i32
    %c0_i32_0 = arith.constant 0 : i32
    %c0_i32_1 = arith.constant 0 : i32
    %c0_i32_2 = arith.constant 0 : i32
    return %arg0, %c0_i32, %c0_i32_0, %c0_i32_1 : i32, i32, i32, i32
  }
  func.func @transform_1(%arg0: i32) -> (i32, i32, i32) {
    %c0_i32 = arith.constant 0 : i32
    %c0_i32_0 = arith.constant 0 : i32
    %c0_i32_1 = arith.constant 0 : i32
    %c0_i32_2 = arith.constant 0 : i32
    return %c0_i32, %c0_i32_0, %c0_i32_1 : i32, i32, i32
  }
  func.func @transform_2(%arg0: i32) -> (i32, i32) {
    %c0_i32 = arith.constant 0 : i32
    %c0_i32_0 = arith.constant 0 : i32
    %c0_i32_1 = arith.constant 0 : i32
    return %c0_i32, %c0_i32_0 : i32, i32
  }
  func.func @transform_3(%arg0: i32) -> (i32, i32, i32) {
    %c0_i32 = arith.constant 0 : i32
    %c0_i32_0 = arith.constant 0 : i32
    %c0_i32_1 = arith.constant 0 : i32
    %c0_i32_2 = arith.constant 0 : i32
    return %c0_i32, %c0_i32_0, %c0_i32_1 : i32, i32, i32
  }
  func.func @transform_4(%arg0: i32) -> (i32, i32) {
    %c0_i32 = arith.constant 0 : i32
    %c0_i32_0 = arith.constant 0 : i32
    %c0_i32_1 = arith.constant 0 : i32
    return %c0_i32, %c0_i32_0 : i32, i32
  }
  func.func @transform_5(%arg0: i32) -> (i32, i32, i32, i32) {
    %c0_i32 = arith.constant 0 : i32
    %c0_i32_0 = arith.constant 0 : i32
    %c0_i32_1 = arith.constant 0 : i32
    %c0_i32_2 = arith.constant 0 : i32
    return %arg0, %c0_i32, %c0_i32_0, %c0_i32_1 : i32, i32, i32, i32
  }
}

</mosaic_0001>

<llo_original>
// kernel: tpu_custom_call.1
$region0: #{tpu_custom_call.1}
  #allocation0 [shape = 'u32[]', space=smem, size = 0x4, offset = 0x4, fixed_abs, tag = 'smem constant byte address 0x4 - core index']
  #allocation1 [shape = 'u32[72,128]{1,0:T(1,128)}', space=vmem, size = 0x9000, scoped, tag = 'internal scratch']
  %s0 = inlined_call_operand.vmem [shape: f32[2,16,16,4], index: 0, kind: input, shape index: {}]
  %s1 = inlined_call_operand.vmem [shape: bf16[3,12,4], index: 1, kind: input, shape index: {}]
  %s2 = inlined_call_operand.vmem [shape: f32[1,4], index: 2, kind: input, shape index: {}]
  %s3 = inlined_call_operand.vmem [shape: bf16[3,12,4], index: 3, kind: input, shape index: {}]
  %s4 = inlined_call_operand.vmem [shape: f32[1,4], index: 4, kind: input, shape index: {}]
  %s5 = inlined_call_operand.vmem [shape: f32[2,16,16,4], index: 5, kind: output, shape index: {}]
  %s6 = sld [smem:[#allocation0]]
  $region53: #{tpu_custom_call.1} parent=0
    _
  %s8 = ssub.s32 1, %s6
  %s9 = scalar_select 0, %s8, %s6
  loop: start=0, step=1, limit=4
  $region2: #{tpu_custom_call.1} parent=0 // loop_pre_header
    _
  $region3: #{tpu_custom_call.1} parent=0 // loop_header
    %s11 = sphi 0, %s15
    %p12 = scmp.ge.s32.totalorder %s11, 4
    %s21 = sphi 0, %s23
    %s24 = sphi 0, %s21
    %s25 = sphi 0, %s24
    %s41 = sphi 0, %s25
    %s45 = sphi 0, %s45
    %s47 = sphi 0, %s45
    %s48 = sphi 0, %s47
    %s62 = sphi 0, %s48
    %s66 = sphi 0, %s66
    %s68 = sphi 0, %s66
    %s69 = sphi 0, %s68
    %s83 = sphi 0, %s69
    %s87 = sphi 0, %s87
    %s89 = sphi 0, %s87
    %s90 = sphi 0, %s89
    %s104 = sphi 0, %s90
    %s108 = sphi 0, %s108
    %s110 = sphi 0, %s108
    %s111 = sphi 0, %s110
    %s125 = sphi 0, %s111
    %s131 = sphi 0, %s133
    %s134 = sphi 0, %s131
    %s135 = sphi 0, %s134
    %s151 = sphi 0, %s135
  $region4: #{tpu_custom_call.1} parent=0 // loop_header_branch
    %14 = sbr.rel (%p12) target = $region8
  $region5: #{tpu_custom_call.1} parent=0 // loop_body
    %s16 = ssub.s32 %s11, 1
    %s17 = ssub.s32 %s11, 2
    %s18 = sadd.s32 %s11, 1
    %s19 = ssub.s32 %s11, %s18
    %p20 = scmp.eq.s32.totalorder %s19, 0
    %s22 = sadd.s32 %s21, 1
    %s23 = scalar_select %p20, %s21, %s22
    %p26 = pneg %p20
    %p27 = scmp.eq.s32.totalorder %s11, 1
    %p28 = por %p26, %p27
    %p29 = scmp.ne.s32.totalorder %s21, %s24
    %p30 = scmp.eq.s32.totalorder %s11, 0
    %p31 = por %p29, %p30
    %p32 = scmp.ne.s32.totalorder %s21, %s24
    %p33 = scmp.eq.s32.totalorder %s16, 1
    %p34 = por %p32, %p33
    %p35 = scmp.ne.s32.totalorder %s24, %s25
    %p36 = scmp.eq.s32.totalorder %s16, 0
    %p37 = por %p35, %p36
    %p38 = scmp.ne.s32.totalorder %s24, %s25
    %p39 = scmp.eq.s32.totalorder %s17, 1
    %p40 = por %p38, %p39
    %p42 = scmp.ne.s32.totalorder %s25, %s41
    %p43 = scmp.eq.s32.totalorder %s17, 0
    %p44 = por %p42, %p43
    %s46 = sadd.s32 %s45, 1
    %p49 = scmp.eq.s32.totalorder %s11, 1
    %p50 = scmp.ne.s32.totalorder %s45, %s47
    %p51 = scmp.eq.s32.totalorder %s11, 0
    %p52 = por %p50, %p51
    %p53 = scmp.ne.s32.totalorder %s45, %s47
    %p54 = scmp.eq.s32.totalorder %s16, 1
    %p55 = por %p53, %p54
    %p56 = scmp.ne.s32.totalorder %s47, %s48
    %p57 = scmp.eq.s32.totalorder %s16, 0
    %p58 = por %p56, %p57
    %p59 = scmp.ne.s32.totalorder %s47, %s48
    %p60 = scmp.eq.s32.totalorder %s17, 1
    %p61 = por %p59, %p60
    %p63 = scmp.ne.s32.totalorder %s48, %s62
    %p64 = scmp.eq.s32.totalorder %s17, 0
    %p65 = por %p63, %p64
    %s67 = sadd.s32 %s66, 1
    %p70 = scmp.eq.s32.totalorder %s11, 1
    %p71 = scmp.ne.s32.totalorder %s66, %s68
    %p72 = scmp.eq.s32.totalorder %s11, 0
    %p73 = por %p71, %p72
    %p74 = scmp.ne.s32.totalorder %s66, %s68
    %p75 = scmp.eq.s32.totalorder %s16, 1
    %p76 = por %p74, %p75
    %p77 = scmp.ne.s32.totalorder %s68, %s69
    %p78 = scmp.eq.s32.totalorder %s16, 0
    %p79 = por %p77, %p78
    %p80 = scmp.ne.s32.totalorder %s68, %s69
    %p81 = scmp.eq.s32.totalorder %s17, 1
    %p82 = por %p80, %p81
    %p84 = scmp.ne.s32.totalorder %s69, %s83
    %p85 = scmp.eq.s32.totalorder %s17, 0
    %p86 = por %p84, %p85
    %s88 = sadd.s32 %s87, 1
    %p91 = scmp.eq.s32.totalorder %s11, 1
    %p92 = scmp.ne.s32.totalorder %s87, %s89
    %p93 = scmp.eq.s32.totalorder %s11, 0
    %p94 = por %p92, %p93
    %p95 = scmp.ne.s32.totalorder %s87, %s89
    %p96 = scmp.eq.s32.totalorder %s16, 1
    %p97 = por %p95, %p96
    %p98 = scmp.ne.s32.totalorder %s89, %s90
    %p99 = scmp.eq.s32.totalorder %s16, 0
    %p100 = por %p98, %p99
    %p101 = scmp.ne.s32.totalorder %s89, %s90
    %p102 = scmp.eq.s32.totalorder %s17, 1
    %p103 = por %p101, %p102
    %p105 = scmp.ne.s32.totalorder %s90, %s104
    %p106 = scmp.eq.s32.totalorder %s17, 0
    %p107 = por %p105, %p106
    %s109 = sadd.s32 %s108, 1
    %p112 = scmp.eq.s32.totalorder %s11, 1
    %p113 = scmp.ne.s32.totalorder %s108, %s110
    %p114 = scmp.eq.s32.totalorder %s11, 0
    %p115 = por %p113, %p114
    %p116 = scmp.ne.s32.totalorder %s108, %s110
    %p117 = scmp.eq.s32.totalorder %s16, 1
    %p118 = por %p116, %p117
    %p119 = scmp.ne.s32.totalorder %s110, %s111
    %p120 = scmp.eq.s32.totalorder %s16, 0
    %p121 = por %p119, %p120
    %p122 = scmp.ne.s32.totalorder %s110, %s111
    %p123 = scmp.eq.s32.totalorder %s17, 1
    %p124 = por %p122, %p123
    %p126 = scmp.ne.s32.totalorder %s111, %s125
    %p127 = scmp.eq.s32.totalorder %s17, 0
    %p128 = por %p126, %p127
    %s129 = ssub.s32 %s11, %s18
    %p130 = scmp.eq.s32.totalorder %s129, 0
    %s132 = sadd.s32 %s131, 1
    %s133 = scalar_select %p130, %s131, %s132
    %p136 = pneg %p130
    %p137 = scmp.eq.s32.totalorder %s11, 1
    %p138 = por %p136, %p137
    %p139 = scmp.ne.s32.totalorder %s131, %s134
    %p140 = scmp.eq.s32.totalorder %s11, 0
    %p141 = por %p139, %p140
    %p142 = scmp.ne.s32.totalorder %s131, %s134
    %p143 = scmp.eq.s32.totalorder %s16, 1
    %p144 = por %p142, %p143
    %p145 = scmp.ne.s32.totalorder %s134, %s135
    %p146 = scmp.eq.s32.totalorder %s16, 0
    %p147 = por %p145, %p146
    %p148 = scmp.ne.s32.totalorder %s134, %s135
    %p149 = scmp.eq.s32.totalorder %s17, 1
    %p150 = por %p148, %p149
    %p152 = scmp.ne.s32.totalorder %s135, %s151
    %p153 = scmp.eq.s32.totalorder %s17, 0
    %p154 = por %p152, %p153
    %p155 = scmp.le.s32.totalorder 1, %s11
    %p156 = scmp.lt.s32.totalorder %s11, 3
    %p157 = pnand %p155, %p156
    %p158 = pneg %p157
    // Predicated region
    $region9: #{tpu_custom_call.1} parent=5 // pred_check
      _
    $region10: #{tpu_custom_call.1} parent=5 // pred_check_branch
      %160 = sbr.rel (%p157) target = $region12
    $region11: #{tpu_custom_call.1} parent=5 // pred_region
      %s161 = ssub.s32 %s11, 1
      // Predicated region
      $region13: #{tpu_custom_call.1} parent=11 // pred_check
        %p162 = pneg %p58
      $region14: #{tpu_custom_call.1} parent=11 // pred_check_branch
        %164 = sbr.rel (%p162) target = $region16
      $region15: #{tpu_custom_call.1} parent=11 // pred_region
        _
      $region16: #{tpu_custom_call.1} parent=11 // pred_fallthru
        _
      // Predicated region
      $region17: #{tpu_custom_call.1} parent=11 // pred_check
        %p165 = pneg %p79
      $region18: #{tpu_custom_call.1} parent=11 // pred_check_branch
        %167 = sbr.rel (%p165) target = $region20
      $region19: #{tpu_custom_call.1} parent=11 // pred_region
        _
      $region20: #{tpu_custom_call.1} parent=11 // pred_fallthru
        _
      // Predicated region
      $region21: #{tpu_custom_call.1} parent=11 // pred_check
        %p168 = pneg %p100
      $region22: #{tpu_custom_call.1} parent=11 // pred_check_branch
        %170 = sbr.rel (%p168) target = $region24
      $region23: #{tpu_custom_call.1} parent=11 // pred_region
        _
      $region24: #{tpu_custom_call.1} parent=11 // pred_fallthru
        _
      // Predicated region
      $region25: #{tpu_custom_call.1} parent=11 // pred_check
        %p171 = pneg %p121
      $region26: #{tpu_custom_call.1} parent=11 // pred_check_branch
        %173 = sbr.rel (%p171) target = $region28
      $region27: #{tpu_custom_call.1} parent=11 // pred_region
        _
      $region28: #{tpu_custom_call.1} parent=11 // pred_fallthru
        _
    $region12: #{tpu_custom_call.1} parent=5 // pred_fallthru
      _
    %p174 = scmp.lt.s32.totalorder %s11, 2
    // Predicated region
    $region29: #{tpu_custom_call.1} parent=5 // pred_check
      %p175 = pneg %p174
    $region30: #{tpu_custom_call.1} parent=5 // pred_check_branch
      %177 = sbr.rel (%p175) target = $region32
    $region31: #{tpu_custom_call.1} parent=5 // pred_region
      // Predicated region
      $region33: #{tpu_custom_call.1} parent=31 // pred_check
        %p178 = pneg %p31
      $region34: #{tpu_custom_call.1} parent=31 // pred_check_branch
        %180 = sbr.rel (%p178) target = $region36
      $region35: #{tpu_custom_call.1} parent=31 // pred_region
        %p181 = scmp.lt.s32.totalorder %s11, 1
        %s182 = scalar_select %p181, %s11, 1
        %s183 = smul.addr %s182, 32
        %s184 = smul.addr %s183, 8
        %s185 = scalar_lea.vmem %s0, %s184
      $region36: #{tpu_custom_call.1} parent=31 // pred_fallthru
        _
    $region32: #{tpu_custom_call.1} parent=5 // pred_fallthru
      _
    %p186 = scmp.le.s32.totalorder 1, %s11
    %p187 = scmp.lt.s32.totalorder %s11, 3
    %p188 = pnand %p186, %p187
    %p189 = pneg %p188
    // Predicated region
    $region37: #{tpu_custom_call.1} parent=5 // pred_check
      _
    $region38: #{tpu_custom_call.1} parent=5 // pred_check_branch
      %191 = sbr.rel (%p188) target = $region40
    $region39: #{tpu_custom_call.1} parent=5 // pred_region
      %s192 = ssub.s32 %s11, 1
      %p193 = scmp.lt.s32.totalorder %s16, 1
      %s194 = scalar_select %p193, %s16, 1
      %s195 = smul.addr %s194, 32
      %s196 = smul.addr %s195, 8
      %s197 = scalar_lea.vmem %s0, %s196
      %p198 = pneg %p37
      %p199 = pneg %p34
      %p200 = pneg %p58
      %p201 = pneg %p55
      %p202 = pneg %p79
      %p203 = pneg %p76
      %p204 = pneg %p100
      %p205 = pneg %p97
      %p206 = pneg %p121
      %p207 = pneg %p118
      %p208 = pneg %p147
      %p209 = pneg %p144
      %p210 = scmp.lt.s32.totalorder %s16, 1
      %s211 = scalar_select %p210, %s16, 1
      %s212 = smul.addr %s211, 32
      %s213 = smul.addr %s212, 8
      %s214 = scalar_lea.vmem %s5, %s213
      %p215 = scmp.lt.s32.totalorder %s16, 1
      %s216 = scalar_select %p215, %s16, 1
      %s217 = smul.addr %s216, 32
      %s218 = smul.addr %s217, 8
      %s219 = scalar_lea.vmem %s0, %s218
      %p220 = scmp.lt.s32.totalorder %s16, 1
      %s221 = scalar_select %p220, %s16, 1
      %s222 = smul.addr %s221, 32
      %s223 = smul.addr %s222, 8
      %s224 = scalar_lea.vmem %s5, %s223
      %v226 = vld [vmem:[%s219] sm:$0xff]
      %v227 = vld [vmem:[%s219 + $0x8] sm:$0xff]
      %v228 = vld [vmem:[%s219 + $0x10] sm:$0xff]
      %v229 = vld [vmem:[%s219 + $0x18] sm:$0xff]
      %v230 = vld [vmem:[%s219 + $0x20] sm:$0xff]
      %v231 = vld [vmem:[%s219 + $0x28] sm:$0xff]
      %v232 = vld [vmem:[%s219 + $0x30] sm:$0xff]
      %v233 = vld [vmem:[%s219 + $0x38] sm:$0xff]
      %v234 = vld [vmem:[%s219 + $0x40] sm:$0xff]
      %v235 = vld [vmem:[%s219 + $0x48] sm:$0xff]
      %v236 = vld [vmem:[%s219 + $0x50] sm:$0xff]
      %v237 = vld [vmem:[%s219 + $0x58] sm:$0xff]
      %v238 = vld [vmem:[%s219 + $0x60] sm:$0xff]
      %v239 = vld [vmem:[%s219 + $0x68] sm:$0xff]
      %v240 = vld [vmem:[%s219 + $0x70] sm:$0xff]
      %v241 = vld [vmem:[%s219 + $0x78] sm:$0xff]
      %v242 = vld [vmem:[%s219 + $0x80] sm:$0xff]
      %v243 = vld [vmem:[%s219 + $0x88] sm:$0xff]
      %v244 = vld [vmem:[%s219 + $0x90] sm:$0xff]
      %v245 = vld [vmem:[%s219 + $0x98] sm:$0xff]
      %v246 = vld [vmem:[%s219 + $0xa0] sm:$0xff]
      %v247 = vld [vmem:[%s219 + $0xa8] sm:$0xff]
      %v248 = vld [vmem:[%s219 + $0xb0] sm:$0xff]
      %v249 = vld [vmem:[%s219 + $0xb8] sm:$0xff]
      %v250 = vld [vmem:[%s219 + $0xc0] sm:$0xff]
      %v251 = vld [vmem:[%s219 + $0xc8] sm:$0xff]
      %v252 = vld [vmem:[%s219 + $0xd0] sm:$0xff]
      %v253 = vld [vmem:[%s219 + $0xd8] sm:$0xff]
      %v254 = vld [vmem:[%s219 + $0xe0] sm:$0xff]
      %v255 = vld [vmem:[%s219 + $0xe8] sm:$0xff]
      %v256 = vld [vmem:[%s219 + $0xf0] sm:$0xff]
      %v257 = vld [vmem:[%s219 + $0xf8] sm:$0xff]
      %v258 = vpack.c.bf16 %v226, %v226
      %v259 = vpack.c.bf16 %v227, %v227
      %v260 = vpack.c.bf16 %v228, %v228
      %v261 = vpack.c.bf16 %v229, %v229
      %v262 = vpack.c.bf16 %v230, %v230
      %v263 = vpack.c.bf16 %v231, %v231
      %v264 = vpack.c.bf16 %v232, %v232
      %v265 = vpack.c.bf16 %v233, %v233
      %v266 = vpack.c.bf16 %v234, %v234
      %v267 = vpack.c.bf16 %v235, %v235
      %v268 = vpack.c.bf16 %v236, %v236
      %v269 = vpack.c.bf16 %v237, %v237
      %v270 = vpack.c.bf16 %v238, %v238
      %v271 = vpack.c.bf16 %v239, %v239
      %v272 = vpack.c.bf16 %v240, %v240
      %v273 = vpack.c.bf16 %v241, %v241
      %v274 = vpack.c.bf16 %v242, %v242
      %v275 = vpack.c.bf16 %v243, %v243
      %v276 = vpack.c.bf16 %v244, %v244
      %v277 = vpack.c.bf16 %v245, %v245
      %v278 = vpack.c.bf16 %v246, %v246
      %v279 = vpack.c.bf16 %v247, %v247
      %v280 = vpack.c.bf16 %v248, %v248
      %v281 = vpack.c.bf16 %v249, %v249
      %v282 = vpack.c.bf16 %v250, %v250
      %v283 = vpack.c.bf16 %v251, %v251
      %v284 = vpack.c.bf16 %v252, %v252
      %v285 = vpack.c.bf16 %v253, %v253
      %v286 = vpack.c.bf16 %v254, %v254
      %v287 = vpack.c.bf16 %v255, %v255
      %v288 = vpack.c.bf16 %v256, %v256
      %v289 = vpack.c.bf16 %v257, %v257
      %v290 = vld [vmem:[%s1] sm:$0xf]
      %v291 = vld [vmem:[%s1 + $0x4] sm:$0x3]
      %v292 = vld [vmem:[%s1 + $0x8] sm:$0xf]
      %v293 = vld [vmem:[%s1 + $0xc] sm:$0x3]
      %v294 = vld [vmem:[%s1 + $0x10] sm:$0xf]
      %v295 = vld [vmem:[%s1 + $0x14] sm:$0x3]
      %v328 = vunpack.c.l.b16 %v258
      %v329 = vunpack.c.l.b16 %v259
      %v330 = vunpack.c.l.b16 %v260
      %v331 = vunpack.c.l.b16 %v261
      %v332 = vunpack.c.l.b16 %v262
      %v333 = vunpack.c.l.b16 %v263
      %v334 = vunpack.c.l.b16 %v264
      %v335 = vunpack.c.l.b16 %v265
      %v336 = vunpack.c.l.b16 %v266
      %v337 = vunpack.c.l.b16 %v267
      %v338 = vunpack.c.l.b16 %v268
      %v339 = vunpack.c.l.b16 %v269
      %v340 = vunpack.c.l.b16 %v270
      %v341 = vunpack.c.l.b16 %v271
      %v342 = vunpack.c.l.b16 %v272
      %v343 = vunpack.c.l.b16 %v273
      %v344 = vunpack.c.l.b16 %v274
      %v345 = vunpack.c.l.b16 %v275
      %v346 = vunpack.c.l.b16 %v276
      %v347 = vunpack.c.l.b16 %v277
      %v348 = vunpack.c.l.b16 %v278
      %v349 = vunpack.c.l.b16 %v279
      %v350 = vunpack.c.l.b16 %v280
      %v351 = vunpack.c.l.b16 %v281
      %v352 = vunpack.c.l.b16 %v282
      %v353 = vunpack.c.l.b16 %v283
      %v354 = vunpack.c.l.b16 %v284
      %v355 = vunpack.c.l.b16 %v285
      %v356 = vunpack.c.l.b16 %v286
      %v357 = vunpack.c.l.b16 %v287
      %v358 = vunpack.c.l.b16 %v288
      %v359 = vunpack.c.l.b16 %v289
      %v360 = vpack.c.b16 %v329, %v328
      %v361 = vpack.c.b16 %v331, %v330
      %v362 = vpack.c.b16 %v333, %v332
      %v363 = vpack.c.b16 %v335, %v334
      %v364 = vpack.c.b16 %v337, %v336
      %v365 = vpack.c.b16 %v339, %v338
      %v366 = vpack.c.b16 %v341, %v340
      %v367 = vpack.c.b16 %v343, %v342
      %v368 = vpack.c.b16 %v345, %v344
      %v369 = vpack.c.b16 %v347, %v346
      %v370 = vpack.c.b16 %v349, %v348
      %v371 = vpack.c.b16 %v351, %v350
      %v372 = vpack.c.b16 %v353, %v352
      %v373 = vpack.c.b16 %v355, %v354
      %v374 = vpack.c.b16 %v357, %v356
      %v375 = vpack.c.b16 %v359, %v358
      %v377 = vshrl.u32 0, 16
      %v379 = vrot.slane %v377, 7
      %v380 = vshll.u32 0, 16
      %v382 = vor.u32 %v379, %v380
      %v384 = vshrl.u32 %v360, 16
      %v386 = vrot.slane %v384, 7
      %v387 = vshll.u32 %v360, 16
      %v389 = vor.u32 %v386, %v387
      %v391 = vshrl.u32 %v361, 16
      %v393 = vrot.slane %v391, 7
      %v394 = vshll.u32 %v361, 16
      %v396 = vor.u32 %v393, %v394
      %v398 = vshrl.u32 %v362, 16
      %v400 = vrot.slane %v398, 7
      %v401 = vshll.u32 %v362, 16
      %v403 = vor.u32 %v400, %v401
      %v405 = vshrl.u32 %v363, 16
      %v407 = vrot.slane %v405, 7
      %v408 = vshll.u32 %v363, 16
      %v410 = vor.u32 %v407, %v408
      %v412 = vshrl.u32 %v364, 16
      %v414 = vrot.slane %v412, 7
      %v415 = vshll.u32 %v364, 16
      %v417 = vor.u32 %v414, %v415
      %v419 = vshrl.u32 %v365, 16
      %v421 = vrot.slane %v419, 7
      %v422 = vshll.u32 %v365, 16
      %v424 = vor.u32 %v421, %v422
      %v426 = vshrl.u32 %v366, 16
      %v428 = vrot.slane %v426, 7
      %v429 = vshll.u32 %v366, 16
      %v431 = vor.u32 %v428, %v429
      %v433 = vshrl.u32 %v367, 16
      %v435 = vrot.slane %v433, 7
      %v436 = vshll.u32 %v367, 16
      %v438 = vor.u32 %v435, %v436
      %v440 = vshrl.u32 %v368, 16
      %v442 = vrot.slane %v440, 7
      %v443 = vshll.u32 %v368, 16
      %v445 = vor.u32 %v442, %v443
      %v447 = vshrl.u32 %v369, 16
      %v449 = vrot.slane %v447, 7
      %v450 = vshll.u32 %v369, 16
      %v452 = vor.u32 %v449, %v450
      %v454 = vshrl.u32 %v370, 16
      %v456 = vrot.slane %v454, 7
      %v457 = vshll.u32 %v370, 16
      %v459 = vor.u32 %v456, %v457
      %v461 = vshrl.u32 %v371, 16
      %v463 = vrot.slane %v461, 7
      %v464 = vshll.u32 %v371, 16
      %v466 = vor.u32 %v463, %v464
      %v468 = vshrl.u32 %v372, 16
      %v470 = vrot.slane %v468, 7
      %v471 = vshll.u32 %v372, 16
      %v473 = vor.u32 %v470, %v471
      %v475 = vshrl.u32 %v373, 16
      %v477 = vrot.slane %v475, 7
      %v478 = vshll.u32 %v373, 16
      %v480 = vor.u32 %v477, %v478
      %v482 = vshrl.u32 %v374, 16
      %v484 = vrot.slane %v482, 7
      %v485 = vshll.u32 %v374, 16
      %v487 = vor.u32 %v484, %v485
      %v489 = vshrl.u32 %v375, 16
      %v491 = vrot.slane %v489, 7
      %v492 = vshll.u32 %v375, 16
      %v494 = vor.u32 %v491, %v492
      %vm529 = vcmask 1040384
      %vm530 = vsmask.f32 256
      %vm531 = vmand %vm529, %vm530
      %v532 = vsel %vm531, 0, %v382
      %v533 = vsel %vm531, 0, %v389
      %v534 = vsel %vm531, 0, %v396
      %v535 = vsel %vm531, 0, %v403
      %v536 = vsel %vm531, 0, %v410
      %v537 = vsel %vm531, 0, %v417
      %v538 = vsel %vm531, 0, %v424
      %v539 = vsel %vm531, 0, %v431
      %v540 = vsel %vm531, 0, %v438
      %v541 = vsel %vm531, 0, %v445
      %v542 = vsel %vm531, 0, %v452
      %v543 = vsel %vm531, 0, %v459
      %v544 = vsel %vm531, 0, %v466
      %v545 = vsel %vm531, 0, %v473
      %v546 = vsel %vm531, 0, %v480
      %v547 = vsel %vm531, 0, %v487
      %v548 = vsel %vm531, 0, %v494
      %v549 = vsel %vm531, %v379, 0
      %v550 = vsel %vm531, %v386, 0
      %v551 = vsel %vm531, %v393, 0
      %v552 = vsel %vm531, %v400, 0
      %v553 = vsel %vm531, %v407, 0
      %v554 = vsel %vm531, %v414, 0
      %v555 = vsel %vm531, %v421, 0
      %v556 = vsel %vm531, %v428, 0
      %v557 = vsel %vm531, %v435, 0
      %v558 = vsel %vm531, %v442, 0
      %v559 = vsel %vm531, %v449, 0
      %v560 = vsel %vm531, %v456, 0
      %v561 = vsel %vm531, %v463, 0
      %v562 = vsel %vm531, %v470, 0
      %v563 = vsel %vm531, %v477, 0
      %v564 = vsel %vm531, %v484, 0
      %v565 = vsel %vm531, %v491, 0
      %vm566 = vsmask.f32 7424
      %v568 = vshrl.u32 %v532, 16
      %v570 = vshll.u32 %v532, 16
      %v572 = vrot.slane %v570, 1
      %v573 = vor.u32 %v568, %v572
      %v575 = vshll.u32 %v549, 16
      %v577 = vrot.slane %v575, 1
      %v578 = vsel %vm566, %v573, %v577
      %v580 = vshrl.u32 %v533, 16
      %v582 = vshll.u32 %v533, 16
      %v584 = vrot.slane %v582, 1
      %v585 = vor.u32 %v580, %v584
      %v587 = vshll.u32 %v550, 16
      %v589 = vrot.slane %v587, 1
      %v590 = vsel %vm566, %v585, %v589
      %v592 = vshrl.u32 %v534, 16
      %v594 = vshll.u32 %v534, 16
      %v596 = vrot.slane %v594, 1
      %v597 = vor.u32 %v592, %v596
      %v599 = vshll.u32 %v551, 16
      %v601 = vrot.slane %v599, 1
      %v602 = vsel %vm566, %v597, %v601
      %v604 = vshrl.u32 %v535, 16
      %v606 = vshll.u32 %v535, 16
      %v608 = vrot.slane %v606, 1
      %v609 = vor.u32 %v604, %v608
      %v611 = vshll.u32 %v552, 16
      %v613 = vrot.slane %v611, 1
      %v614 = vsel %vm566, %v609, %v613
      %v616 = vshrl.u32 %v536, 16
      %v618 = vshll.u32 %v536, 16
      %v620 = vrot.slane %v618, 1
      %v621 = vor.u32 %v616, %v620
      %v623 = vshll.u32 %v553, 16
      %v625 = vrot.slane %v623, 1
      %v626 = vsel %vm566, %v621, %v625
      %v628 = vshrl.u32 %v537, 16
      %v630 = vshll.u32 %v537, 16
      %v632 = vrot.slane %v630, 1
      %v633 = vor.u32 %v628, %v632
      %v635 = vshll.u32 %v554, 16
      %v637 = vrot.slane %v635, 1
      %v638 = vsel %vm566, %v633, %v637
      %v640 = vshrl.u32 %v538, 16
      %v642 = vshll.u32 %v538, 16
      %v644 = vrot.slane %v642, 1
      %v645 = vor.u32 %v640, %v644
      %v647 = vshll.u32 %v555, 16
      %v649 = vrot.slane %v647, 1
      %v650 = vsel %vm566, %v645, %v649
      %v652 = vshrl.u32 %v539, 16
      %v654 = vshll.u32 %v539, 16
      %v656 = vrot.slane %v654, 1
      %v657 = vor.u32 %v652, %v656
      %v659 = vshll.u32 %v556, 16
      %v661 = vrot.slane %v659, 1
      %v662 = vsel %vm566, %v657, %v661
      %v664 = vshrl.u32 %v540, 16
      %v666 = vshll.u32 %v540, 16
      %v668 = vrot.slane %v666, 1
      %v669 = vor.u32 %v664, %v668
      %v671 = vshll.u32 %v557, 16
      %v673 = vrot.slane %v671, 1
      %v674 = vsel %vm566, %v669, %v673
      %v676 = vshrl.u32 %v541, 16
      %v678 = vshll.u32 %v541, 16
      %v680 = vrot.slane %v678, 1
      %v681 = vor.u32 %v676, %v680
      %v683 = vshll.u32 %v558, 16
      %v685 = vrot.slane %v683, 1
      %v686 = vsel %vm566, %v681, %v685
      %v688 = vshrl.u32 %v542, 16
      %v690 = vshll.u32 %v542, 16
      %v692 = vrot.slane %v690, 1
      %v693 = vor.u32 %v688, %v692
      %v695 = vshll.u32 %v559, 16
      %v697 = vrot.slane %v695, 1
      %v698 = vsel %vm566, %v693, %v697
      %v700 = vshrl.u32 %v543, 16
      %v702 = vshll.u32 %v543, 16
      %v704 = vrot.slane %v702, 1
      %v705 = vor.u32 %v700, %v704
      %v707 = vshll.u32 %v560, 16
      %v709 = vrot.slane %v707, 1
      %v710 = vsel %vm566, %v705, %v709
      %v712 = vshrl.u32 %v544, 16
      %v714 = vshll.u32 %v544, 16
      %v716 = vrot.slane %v714, 1
      %v717 = vor.u32 %v712, %v716
      %v719 = vshll.u32 %v561, 16
      %v721 = vrot.slane %v719, 1
      %v722 = vsel %vm566, %v717, %v721
      %v724 = vshrl.u32 %v545, 16
      %v726 = vshll.u32 %v545, 16
      %v728 = vrot.slane %v726, 1
      %v729 = vor.u32 %v724, %v728
      %v731 = vshll.u32 %v562, 16
      %v733 = vrot.slane %v731, 1
      %v734 = vsel %vm566, %v729, %v733
      %v736 = vshrl.u32 %v546, 16
      %v738 = vshll.u32 %v546, 16
      %v740 = vrot.slane %v738, 1
      %v741 = vor.u32 %v736, %v740
      %v743 = vshll.u32 %v563, 16
      %v745 = vrot.slane %v743, 1
      %v746 = vsel %vm566, %v741, %v745
      %v748 = vshrl.u32 %v547, 16
      %v750 = vshll.u32 %v547, 16
      %v752 = vrot.slane %v750, 1
      %v753 = vor.u32 %v748, %v752
      %v755 = vshll.u32 %v564, 16
      %v757 = vrot.slane %v755, 1
      %v758 = vsel %vm566, %v753, %v757
      %759 = vrot.lane.b32.xlu0 %v578, 4
      %v760 = vpop.permute.xlu0 %759
      %761 = vrot.lane.b32.xlu0 %v590, 4
      %v762 = vpop.permute.xlu0 %761
      %763 = vrot.lane.b32.xlu0 %v602, 4
      %v764 = vpop.permute.xlu0 %763
      %765 = vrot.lane.b32.xlu0 %v614, 4
      %v766 = vpop.permute.xlu0 %765
      %767 = vrot.lane.b32.xlu0 %v626, 4
      %v768 = vpop.permute.xlu0 %767
      %769 = vrot.lane.b32.xlu0 %v638, 4
      %v770 = vpop.permute.xlu0 %769
      %771 = vrot.lane.b32.xlu0 %v650, 4
      %v772 = vpop.permute.xlu0 %771
      %773 = vrot.lane.b32.xlu0 %v662, 4
      %v774 = vpop.permute.xlu0 %773
      %775 = vrot.lane.b32.xlu0 %v674, 4
      %v776 = vpop.permute.xlu0 %775
      %777 = vrot.lane.b32.xlu0 %v686, 4
      %v778 = vpop.permute.xlu0 %777
      %779 = vrot.lane.b32.xlu0 %v698, 4
      %v780 = vpop.permute.xlu0 %779
      %781 = vrot.lane.b32.xlu0 %v710, 4
      %v782 = vpop.permute.xlu0 %781
      %783 = vrot.lane.b32.xlu0 %v722, 4
      %v784 = vpop.permute.xlu0 %783
      %785 = vrot.lane.b32.xlu0 %v734, 4
      %v786 = vpop.permute.xlu0 %785
      %787 = vrot.lane.b32.xlu0 %v746, 4
      %v788 = vpop.permute.xlu0 %787
      %789 = vrot.lane.b32.xlu0 %v758, 4
      %v790 = vpop.permute.xlu0 %789
      %vm823 = vcmask 1046528
      %v824 = vrot.slane %v532, 1
      %v825 = vrot.slane %v549, 1
      %v826 = vsel %vm823, %v824, %v825
      %v827 = vrot.slane %v533, 1
      %v828 = vrot.slane %v550, 1
      %v829 = vsel %vm823, %v827, %v828
      %v830 = vrot.slane %v534, 1
      %v831 = vrot.slane %v551, 1
      %v832 = vsel %vm823, %v830, %v831
      %v833 = vrot.slane %v535, 1
      %v834 = vrot.slane %v552, 1
      %v835 = vsel %vm823, %v833, %v834
      %v836 = vrot.slane %v536, 1
      %v837 = vrot.slane %v553, 1
      %v838 = vsel %vm823, %v836, %v837
      %v839 = vrot.slane %v537, 1
      %v840 = vrot.slane %v554, 1
      %v841 = vsel %vm823, %v839, %v840
      %v842 = vrot.slane %v538, 1
      %v843 = vrot.slane %v555, 1
      %v844 = vsel %vm823, %v842, %v843
      %v845 = vrot.slane %v539, 1
      %v846 = vrot.slane %v556, 1
      %v847 = vsel %vm823, %v845, %v846
      %v848 = vrot.slane %v540, 1
      %v849 = vrot.slane %v557, 1
      %v850 = vsel %vm823, %v848, %v849
      %v851 = vrot.slane %v541, 1
      %v852 = vrot.slane %v558, 1
      %v853 = vsel %vm823, %v851, %v852
      %v854 = vrot.slane %v542, 1
      %v855 = vrot.slane %v559, 1
      %v856 = vsel %vm823, %v854, %v855
      %v857 = vrot.slane %v543, 1
      %v858 = vrot.slane %v560, 1
      %v859 = vsel %vm823, %v857, %v858
      %v860 = vrot.slane %v544, 1
      %v861 = vrot.slane %v561, 1
      %v862 = vsel %vm823, %v860, %v861
      %v863 = vrot.slane %v545, 1
      %v864 = vrot.slane %v562, 1
      %v865 = vsel %vm823, %v863, %v864
      %v866 = vrot.slane %v546, 1
      %v867 = vrot.slane %v563, 1
      %v868 = vsel %vm823, %v866, %v867
      %v869 = vrot.slane %v547, 1
      %v870 = vrot.slane %v564, 1
      %v871 = vsel %vm823, %v869, %v870
      %872 = vrot.lane.b32.xlu0 %v826, 8
      %v873 = vpop.permute.xlu0 %872
      %874 = vrot.lane.b32.xlu0 %v829, 8
      %v875 = vpop.permute.xlu0 %874
      %876 = vrot.lane.b32.xlu0 %v832, 8
      %v877 = vpop.permute.xlu0 %876
      %878 = vrot.lane.b32.xlu0 %v835, 8
      %v879 = vpop.permute.xlu0 %878
      %880 = vrot.lane.b32.xlu0 %v838, 8
      %v881 = vpop.permute.xlu0 %880
      %882 = vrot.lane.b32.xlu0 %v841, 8
      %v883 = vpop.permute.xlu0 %882
      %884 = vrot.lane.b32.xlu0 %v844, 8
      %v885 = vpop.permute.xlu0 %884
      %886 = vrot.lane.b32.xlu0 %v847, 8
      %v887 = vpop.permute.xlu0 %886
      %888 = vrot.lane.b32.xlu0 %v850, 8
      %v889 = vpop.permute.xlu0 %888
      %890 = vrot.lane.b32.xlu0 %v853, 8
      %v891 = vpop.permute.xlu0 %890
      %892 = vrot.lane.b32.xlu0 %v856, 8
      %v893 = vpop.permute.xlu0 %892
      %894 = vrot.lane.b32.xlu0 %v859, 8
      %v895 = vpop.permute.xlu0 %894
      %896 = vrot.lane.b32.xlu0 %v862, 8
      %v897 = vpop.permute.xlu0 %896
      %898 = vrot.lane.b32.xlu0 %v865, 8
      %v899 = vpop.permute.xlu0 %898
      %900 = vrot.lane.b32.xlu0 %v868, 8
      %v901 = vpop.permute.xlu0 %900
      %902 = vrot.lane.b32.xlu0 %v871, 8
      %v903 = vpop.permute.xlu0 %902
      %vm904 = vcmask 31744
      %v906 = vsel %vm904, %v532, %v760
      %v908 = vsel %vm904, %v533, %v762
      %v910 = vsel %vm904, %v534, %v764
      %v912 = vsel %vm904, %v535, %v766
      %v914 = vsel %vm904, %v536, %v768
      %v916 = vsel %vm904, %v537, %v770
      %v918 = vsel %vm904, %v538, %v772
      %v920 = vsel %vm904, %v539, %v774
      %v922 = vsel %vm904, %v540, %v776
      %v924 = vsel %vm904, %v541, %v778
      %v926 = vsel %vm904, %v542, %v780
      %v928 = vsel %vm904, %v543, %v782
      %v930 = vsel %vm904, %v544, %v784
      %v932 = vsel %vm904, %v545, %v786
      %v934 = vsel %vm904, %v546, %v788
      %v936 = vsel %vm904, %v547, %v790
      %vm937 = vcmask 64512
      %v939 = vsel %vm937, %v906, %v873
      %v941 = vsel %vm937, %v908, %v875
      %v943 = vsel %vm937, %v910, %v877
      %v945 = vsel %vm937, %v912, %v879
      %v947 = vsel %vm937, %v914, %v881
      %v949 = vsel %vm937, %v916, %v883
      %v951 = vsel %vm937, %v918, %v885
      %v953 = vsel %vm937, %v920, %v887
      %v955 = vsel %vm937, %v922, %v889
      %v957 = vsel %vm937, %v924, %v891
      %v959 = vsel %vm937, %v926, %v893
      %v961 = vsel %vm937, %v928, %v895
      %v963 = vsel %vm937, %v930, %v897
      %v965 = vsel %vm937, %v932, %v899
      %v967 = vsel %vm937, %v934, %v901
      %v969 = vsel %vm937, %v936, %v903
      %v971 = vshrl.u32 %v548, 16
      %v973 = vshll.u32 %v548, 16
      %v975 = vrot.slane %v973, 1
      %v976 = vor.u32 %v971, %v975
      %v978 = vshll.u32 %v565, 16
      %v980 = vrot.slane %v978, 1
      %v981 = vsel %vm566, %v976, %v980
      %982 = vrot.lane.b32.xlu0 %v981, 4
      %v983 = vpop.permute.xlu0 %982
      %v986 = vrot.slane %v548, 1
      %v987 = vrot.slane %v565, 1
      %v988 = vsel %vm823, %v986, %v987
      %989 = vrot.lane.b32.xlu0 %v988, 8
      %v990 = vpop.permute.xlu0 %989
      %v992 = vsel %vm904, %v548, %v983
      %v994 = vsel %vm937, %v992, %v990
      %v997 = vunpack.c.l.b16 %v292
      %v998 = vunpack.c.l.b16 %v293
      %v999 = vpack.c.b16 %v998, %v997
      %vm1000 = vcmask 97280
      %v1001 = vsel %vm1000, %v941, 0
      %v1003 = vsel %vm1000, %v943, 0
      %v1005 = vsel %vm1000, %v945, 0
      %v1007 = vsel %vm1000, %v947, 0
      %v1009 = vsel %vm1000, %v949, 0
      %v1011 = vsel %vm1000, %v951, 0
      %v1013 = vsel %vm1000, %v953, 0
      %v1015 = vsel %vm1000, %v955, 0
      %v1017 = vsel %vm1000, %v957, 0
      %v1019 = vsel %vm1000, %v959, 0
      %v1021 = vsel %vm1000, %v961, 0
      %v1023 = vsel %vm1000, %v963, 0
      %v1025 = vsel %vm1000, %v965, 0
      %v1027 = vsel %vm1000, %v967, 0
      %v1029 = vsel %vm1000, %v969, 0
      %v1031 = vsel %vm1000, %v994, 0
      %vm1033 = vcmask 1045504
      %v1035 = vsel %vm1033, %v999, 0
      %1037 = vmatpush.bf16.msra.mxu0 0
      %1038 = vmatpush.bf16.msra.mxu0 0
      %1039 = vmatpush.bf16.msra.mxu0 0
      %1040 = vmatpush.bf16.msra.mxu0 0
      %1041 = vmatpush.bf16.msra.mxu0 0
      %1042 = vmatpush.bf16.msra.mxu0 0
      %1043 = vmatpush.bf16.msra.mxu0 0
      %1044 = vmatpush.bf16.msra.mxu0 %v1035
      %1045 = vmatmul.bf16.gmra.mxu0 %v1001
      %v1046 = vpop.f32.mrf.mxu0
      %v1047 = vadd.f32 0.0, %v1046
      %v1048 = vpop.f32.mrf.mxu0
      %v1049 = vadd.f32 0.0, %v1048
      %1050 = vmatmul.bf16.gmra.mxu0 %v1003
      %v1051 = vpop.f32.mrf.mxu0
      %v1052 = vadd.f32 0.0, %v1051
      %v1053 = vpop.f32.mrf.mxu0
      %v1054 = vadd.f32 0.0, %v1053
      %1055 = vmatmul.bf16.gmra.mxu0 %v1005
      %v1056 = vpop.f32.mrf.mxu0
      %v1057 = vadd.f32 0.0, %v1056
      %v1058 = vpop.f32.mrf.mxu0
      %v1059 = vadd.f32 0.0, %v1058
      %1060 = vmatmul.bf16.gmra.mxu0 %v1007
      %v1061 = vpop.f32.mrf.mxu0
      %v1062 = vadd.f32 0.0, %v1061
      %v1063 = vpop.f32.mrf.mxu0
      %v1064 = vadd.f32 0.0, %v1063
      %1065 = vmatmul.bf16.gmra.mxu0 %v1009
      %v1066 = vpop.f32.mrf.mxu0
      %v1067 = vadd.f32 0.0, %v1066
      %v1068 = vpop.f32.mrf.mxu0
      %v1069 = vadd.f32 0.0, %v1068
      %1070 = vmatmul.bf16.gmra.mxu0 %v1011
      %v1071 = vpop.f32.mrf.mxu0
      %v1072 = vadd.f32 0.0, %v1071
      %v1073 = vpop.f32.mrf.mxu0
      %v1074 = vadd.f32 0.0, %v1073
      %1075 = vmatmul.bf16.gmra.mxu0 %v1013
      %v1076 = vpop.f32.mrf.mxu0
      %v1077 = vadd.f32 0.0, %v1076
      %v1078 = vpop.f32.mrf.mxu0
      %v1079 = vadd.f32 0.0, %v1078
      %1080 = vmatmul.bf16.gmra.mxu0 %v1015
      %v1081 = vpop.f32.mrf.mxu0
      %v1082 = vadd.f32 0.0, %v1081
      %v1083 = vpop.f32.mrf.mxu0
      %v1084 = vadd.f32 0.0, %v1083
      %1085 = vmatmul.bf16.gmra.mxu0 %v1017
      %v1086 = vpop.f32.mrf.mxu0
      %v1087 = vadd.f32 0.0, %v1086
      %v1088 = vpop.f32.mrf.mxu0
      %v1089 = vadd.f32 0.0, %v1088
      %1090 = vmatmul.bf16.gmra.mxu0 %v1019
      %v1091 = vpop.f32.mrf.mxu0
      %v1092 = vadd.f32 0.0, %v1091
      %v1093 = vpop.f32.mrf.mxu0
      %v1094 = vadd.f32 0.0, %v1093
      %1095 = vmatmul.bf16.gmra.mxu0 %v1021
      %v1096 = vpop.f32.mrf.mxu0
      %v1097 = vadd.f32 0.0, %v1096
      %v1098 = vpop.f32.mrf.mxu0
      %v1099 = vadd.f32 0.0, %v1098
      %1100 = vmatmul.bf16.gmra.mxu0 %v1023
      %v1101 = vpop.f32.mrf.mxu0
      %v1102 = vadd.f32 0.0, %v1101
      %v1103 = vpop.f32.mrf.mxu0
      %v1104 = vadd.f32 0.0, %v1103
      %1105 = vmatmul.bf16.gmra.mxu0 %v1025
      %v1106 = vpop.f32.mrf.mxu0
      %v1107 = vadd.f32 0.0, %v1106
      %v1108 = vpop.f32.mrf.mxu0
      %v1109 = vadd.f32 0.0, %v1108
      %1110 = vmatmul.bf16.gmra.mxu0 %v1027
      %v1111 = vpop.f32.mrf.mxu0
      %v1112 = vadd.f32 0.0, %v1111
      %v1113 = vpop.f32.mrf.mxu0
      %v1114 = vadd.f32 0.0, %v1113
      %1115 = vmatmul.bf16.gmra.mxu0 %v1029
      %v1116 = vpop.f32.mrf.mxu0
      %v1117 = vadd.f32 0.0, %v1116
      %v1118 = vpop.f32.mrf.mxu0
      %v1119 = vadd.f32 0.0, %v1118
      %1120 = vmatmul.bf16.gmra.mxu0 %v1031
      %v1121 = vpop.f32.mrf.mxu0
      %v1122 = vadd.f32 0.0, %v1121
      %v1123 = vpop.f32.mrf.mxu0
      %v1124 = vadd.f32 0.0, %v1123
      %1125 = vdwg.mxu0
      %v1128 = vunpack.c.l.b16 %v290
      %v1129 = vunpack.c.l.b16 %v291
      %v1130 = vpack.c.b16 %v1129, %v1128
      %v1131 = vsel %vm1000, %v939, 0
      %v1134 = vsel %vm1033, %v1130, 0
      %1136 = vmatpush.bf16.msra.mxu0 0
      %1137 = vmatpush.bf16.msra.mxu0 0
      %1138 = vmatpush.bf16.msra.mxu0 0
      %1139 = vmatpush.bf16.msra.mxu0 0
      %1140 = vmatpush.bf16.msra.mxu0 0
      %1141 = vmatpush.bf16.msra.mxu0 0
      %1142 = vmatpush.bf16.msra.mxu0 0
      %1143 = vmatpush.bf16.msra.mxu0 %v1134
      %1144 = vmatmul.bf16.gmra.mxu0 %v1131
      %v1145 = vpop.f32.mrf.mxu0
      %v1146 = vadd.f32 %v1047, %v1145
      %v1147 = vpop.f32.mrf.mxu0
      %v1148 = vadd.f32 %v1049, %v1147
      %1149 = vmatmul.bf16.gmra.mxu0 %v1001
      %v1150 = vpop.f32.mrf.mxu0
      %v1151 = vadd.f32 %v1052, %v1150
      %v1152 = vpop.f32.mrf.mxu0
      %v1153 = vadd.f32 %v1054, %v1152
      %1154 = vmatmul.bf16.gmra.mxu0 %v1003
      %v1155 = vpop.f32.mrf.mxu0
      %v1156 = vadd.f32 %v1057, %v1155
      %v1157 = vpop.f32.mrf.mxu0
      %v1158 = vadd.f32 %v1059, %v1157
      %1159 = vmatmul.bf16.gmra.mxu0 %v1005
      %v1160 = vpop.f32.mrf.mxu0
      %v1161 = vadd.f32 %v1062, %v1160
      %v1162 = vpop.f32.mrf.mxu0
      %v1163 = vadd.f32 %v1064, %v1162
      %1164 = vmatmul.bf16.gmra.mxu0 %v1007
      %v1165 = vpop.f32.mrf.mxu0
      %v1166 = vadd.f32 %v1067, %v1165
      %v1167 = vpop.f32.mrf.mxu0
      %v1168 = vadd.f32 %v1069, %v1167
      %1169 = vmatmul.bf16.gmra.mxu0 %v1009
      %v1170 = vpop.f32.mrf.mxu0
      %v1171 = vadd.f32 %v1072, %v1170
      %v1172 = vpop.f32.mrf.mxu0
      %v1173 = vadd.f32 %v1074, %v1172
      %1174 = vmatmul.bf16.gmra.mxu0 %v1011
      %v1175 = vpop.f32.mrf.mxu0
      %v1176 = vadd.f32 %v1077, %v1175
      %v1177 = vpop.f32.mrf.mxu0
      %v1178 = vadd.f32 %v1079, %v1177
      %1179 = vmatmul.bf16.gmra.mxu0 %v1013
      %v1180 = vpop.f32.mrf.mxu0
      %v1181 = vadd.f32 %v1082, %v1180
      %v1182 = vpop.f32.mrf.mxu0
      %v1183 = vadd.f32 %v1084, %v1182
      %1184 = vmatmul.bf16.gmra.mxu0 %v1015
      %v1185 = vpop.f32.mrf.mxu0
      %v1186 = vadd.f32 %v1087, %v1185
      %v1187 = vpop.f32.mrf.mxu0
      %v1188 = vadd.f32 %v1089, %v1187
      %1189 = vmatmul.bf16.gmra.mxu0 %v1017
      %v1190 = vpop.f32.mrf.mxu0
      %v1191 = vadd.f32 %v1092, %v1190
      %v1192 = vpop.f32.mrf.mxu0
      %v1193 = vadd.f32 %v1094, %v1192
      %1194 = vmatmul.bf16.gmra.mxu0 %v1019
      %v1195 = vpop.f32.mrf.mxu0
      %v1196 = vadd.f32 %v1097, %v1195
      %v1197 = vpop.f32.mrf.mxu0
      %v1198 = vadd.f32 %v1099, %v1197
      %1199 = vmatmul.bf16.gmra.mxu0 %v1021
      %v1200 = vpop.f32.mrf.mxu0
      %v1201 = vadd.f32 %v1102, %v1200
      %v1202 = vpop.f32.mrf.mxu0
      %v1203 = vadd.f32 %v1104, %v1202
      %1204 = vmatmul.bf16.gmra.mxu0 %v1023
      %v1205 = vpop.f32.mrf.mxu0
      %v1206 = vadd.f32 %v1107, %v1205
      %v1207 = vpop.f32.mrf.mxu0
      %v1208 = vadd.f32 %v1109, %v1207
      %1209 = vmatmul.bf16.gmra.mxu0 %v1025
      %v1210 = vpop.f32.mrf.mxu0
      %v1211 = vadd.f32 %v1112, %v1210
      %v1212 = vpop.f32.mrf.mxu0
      %v1213 = vadd.f32 %v1114, %v1212
      %1214 = vmatmul.bf16.gmra.mxu0 %v1027
      %v1215 = vpop.f32.mrf.mxu0
      %v1216 = vadd.f32 %v1117, %v1215
      %v1217 = vpop.f32.mrf.mxu0
      %v1218 = vadd.f32 %v1119, %v1217
      %1219 = vmatmul.bf16.gmra.mxu0 %v1029
      %v1220 = vpop.f32.mrf.mxu0
      %v1221 = vadd.f32 %v1122, %v1220
      %v1222 = vpop.f32.mrf.mxu0
      %v1223 = vadd.f32 %v1124, %v1222
      %1224 = vdwg.mxu0
      %v1227 = vunpack.c.l.b16 %v294
      %v1228 = vunpack.c.l.b16 %v295
      %v1229 = vpack.c.b16 %v1228, %v1227
      %v1231 = vsel %vm1033, %v1229, 0
      %1233 = vmatpush.bf16.msra.mxu0 0
      %1234 = vmatpush.bf16.msra.mxu0 0
      %1235 = vmatpush.bf16.msra.mxu0 0
      %1236 = vmatpush.bf16.msra.mxu0 0
      %1237 = vmatpush.bf16.msra.mxu0 0
      %1238 = vmatpush.bf16.msra.mxu0 0
      %1239 = vmatpush.bf16.msra.mxu0 0
      %1240 = vmatpush.bf16.msra.mxu0 %v1231
      %1241 = vmatmul.bf16.gmra.mxu0 %v1003
      %v1242 = vpop.f32.mrf.mxu0
      %v1243 = vadd.f32 0.0, %v1242
      %v1244 = vpop.f32.mrf.mxu0
      %v1245 = vadd.f32 0.0, %v1244
      %1246 = vmatmul.bf16.gmra.mxu0 %v1005
      %v1247 = vpop.f32.mrf.mxu0
      %v1248 = vadd.f32 0.0, %v1247
      %v1249 = vpop.f32.mrf.mxu0
      %v1250 = vadd.f32 0.0, %v1249
      %1251 = vmatmul.bf16.gmra.mxu0 %v1007
      %v1252 = vpop.f32.mrf.mxu0
      %v1253 = vadd.f32 0.0, %v1252
      %v1254 = vpop.f32.mrf.mxu0
      %v1255 = vadd.f32 0.0, %v1254
      %1256 = vmatmul.bf16.gmra.mxu0 %v1009
      %v1257 = vpop.f32.mrf.mxu0
      %v1258 = vadd.f32 0.0, %v1257
      %v1259 = vpop.f32.mrf.mxu0
      %v1260 = vadd.f32 0.0, %v1259
      %1261 = vmatmul.bf16.gmra.mxu0 %v1011
      %v1262 = vpop.f32.mrf.mxu0
      %v1263 = vadd.f32 0.0, %v1262
      %v1264 = vpop.f32.mrf.mxu0
      %v1265 = vadd.f32 0.0, %v1264
      %1266 = vmatmul.bf16.gmra.mxu0 %v1013
      %v1267 = vpop.f32.mrf.mxu0
      %v1268 = vadd.f32 0.0, %v1267
      %v1269 = vpop.f32.mrf.mxu0
      %v1270 = vadd.f32 0.0, %v1269
      %1271 = vmatmul.bf16.gmra.mxu0 %v1015
      %v1272 = vpop.f32.mrf.mxu0
      %v1273 = vadd.f32 0.0, %v1272
      %v1274 = vpop.f32.mrf.mxu0
      %v1275 = vadd.f32 0.0, %v1274
      %1276 = vmatmul.bf16.gmra.mxu0 %v1017
      %v1277 = vpop.f32.mrf.mxu0
      %v1278 = vadd.f32 0.0, %v1277
      %v1279 = vpop.f32.mrf.mxu0
      %v1280 = vadd.f32 0.0, %v1279
      %1281 = vmatmul.bf16.gmra.mxu0 %v1019
      %v1282 = vpop.f32.mrf.mxu0
      %v1283 = vadd.f32 0.0, %v1282
      %v1284 = vpop.f32.mrf.mxu0
      %v1285 = vadd.f32 0.0, %v1284
      %1286 = vmatmul.bf16.gmra.mxu0 %v1021
      %v1287 = vpop.f32.mrf.mxu0
      %v1288 = vadd.f32 0.0, %v1287
      %v1289 = vpop.f32.mrf.mxu0
      %v1290 = vadd.f32 0.0, %v1289
      %1291 = vmatmul.bf16.gmra.mxu0 %v1023
      %v1292 = vpop.f32.mrf.mxu0
      %v1293 = vadd.f32 0.0, %v1292
      %v1294 = vpop.f32.mrf.mxu0
      %v1295 = vadd.f32 0.0, %v1294
      %1296 = vmatmul.bf16.gmra.mxu0 %v1025
      %v1297 = vpop.f32.mrf.mxu0
      %v1298 = vadd.f32 0.0, %v1297
      %v1299 = vpop.f32.mrf.mxu0
      %v1300 = vadd.f32 0.0, %v1299
      %1301 = vmatmul.bf16.gmra.mxu0 %v1027
      %v1302 = vpop.f32.mrf.mxu0
      %v1303 = vadd.f32 0.0, %v1302
      %v1304 = vpop.f32.mrf.mxu0
      %v1305 = vadd.f32 0.0, %v1304
      %1306 = vmatmul.bf16.gmra.mxu0 %v1029
      %v1307 = vpop.f32.mrf.mxu0
      %v1308 = vadd.f32 0.0, %v1307
      %v1309 = vpop.f32.mrf.mxu0
      %v1310 = vadd.f32 0.0, %v1309
      %1311 = vmatmul.bf16.gmra.mxu0 %v1031
      %v1312 = vpop.f32.mrf.mxu0
      %v1313 = vadd.f32 0.0, %v1312
      %v1314 = vpop.f32.mrf.mxu0
      %v1315 = vadd.f32 0.0, %v1314
      %1316 = vmatmul.bf16.gmra.mxu0 %v1131
      %v1317 = vpop.f32.mrf.mxu0
      %v1318 = vadd.f32 0.0, %v1317
      %v1319 = vpop.f32.mrf.mxu0
      %v1320 = vadd.f32 0.0, %v1319
      %1321 = vdwg.mxu0
      %v1322 = vadd.f32 %v1146, %v1243
      %v1323 = vadd.f32 %v1148, %v1245
      %v1324 = vadd.f32 %v1151, %v1248
      %v1325 = vadd.f32 %v1153, %v1250
      %v1326 = vadd.f32 %v1156, %v1253
      %v1327 = vadd.f32 %v1158, %v1255
      %v1328 = vadd.f32 %v1161, %v1258
      %v1329 = vadd.f32 %v1163, %v1260
      %v1330 = vadd.f32 %v1166, %v1263
      %v1331 = vadd.f32 %v1168, %v1265
      %v1332 = vadd.f32 %v1171, %v1268
      %v1333 = vadd.f32 %v1173, %v1270
      %v1334 = vadd.f32 %v1176, %v1273
      %v1335 = vadd.f32 %v1178, %v1275
      %v1336 = vadd.f32 %v1181, %v1278
      %v1337 = vadd.f32 %v1183, %v1280
      %v1338 = vadd.f32 %v1186, %v1283
      %v1339 = vadd.f32 %v1188, %v1285
      %v1340 = vadd.f32 %v1191, %v1288
      %v1341 = vadd.f32 %v1193, %v1290
      %v1342 = vadd.f32 %v1196, %v1293
      %v1343 = vadd.f32 %v1198, %v1295
      %v1344 = vadd.f32 %v1201, %v1298
      %v1345 = vadd.f32 %v1203, %v1300
      %v1346 = vadd.f32 %v1206, %v1303
      %v1347 = vadd.f32 %v1208, %v1305
      %v1348 = vadd.f32 %v1211, %v1308
      %v1349 = vadd.f32 %v1213, %v1310
      %v1350 = vadd.f32 %v1216, %v1313
      %v1351 = vadd.f32 %v1218, %v1315
      %v1352 = vadd.f32 %v1221, %v1318
      %v1353 = vadd.f32 %v1223, %v1320
      %v1354 = vld [vmem:[%s2] sm:$0x1]
      %v1356 = vperm.slane %v1354, 0
      %v1358 = vadd.f32 %v1322, %v1356
      %v1359 = vadd.f32 %v1323, %v1356
      %v1360 = vadd.f32 %v1324, %v1356
      %v1361 = vadd.f32 %v1325, %v1356
      %v1362 = vadd.f32 %v1326, %v1356
      %v1363 = vadd.f32 %v1327, %v1356
      %v1364 = vadd.f32 %v1328, %v1356
      %v1365 = vadd.f32 %v1329, %v1356
      %v1366 = vadd.f32 %v1330, %v1356
      %v1367 = vadd.f32 %v1331, %v1356
      %v1368 = vadd.f32 %v1332, %v1356
      %v1369 = vadd.f32 %v1333, %v1356
      %v1370 = vadd.f32 %v1334, %v1356
      %v1371 = vadd.f32 %v1335, %v1356
      %v1372 = vadd.f32 %v1336, %v1356
      %v1373 = vadd.f32 %v1337, %v1356
      %v1374 = vadd.f32 %v1338, %v1356
      %v1375 = vadd.f32 %v1339, %v1356
      %v1376 = vadd.f32 %v1340, %v1356
      %v1377 = vadd.f32 %v1341, %v1356
      %v1378 = vadd.f32 %v1342, %v1356
      %v1379 = vadd.f32 %v1343, %v1356
      %v1380 = vadd.f32 %v1344, %v1356
      %v1381 = vadd.f32 %v1345, %v1356
      %v1382 = vadd.f32 %v1346, %v1356
      %v1383 = vadd.f32 %v1347, %v1356
      %v1384 = vadd.f32 %v1348, %v1356
      %v1385 = vadd.f32 %v1349, %v1356
      %v1386 = vadd.f32 %v1350, %v1356
      %v1387 = vadd.f32 %v1351, %v1356
      %v1388 = vadd.f32 %v1352, %v1356
      %v1389 = vadd.f32 %v1353, %v1356
      %v1390 = vmax.f32 %v1358, 0.0
      %v1391 = vmax.f32 %v1359, 0.0
      %v1392 = vmax.f32 %v1360, 0.0
      %v1393 = vmax.f32 %v1361, 0.0
      %v1394 = vmax.f32 %v1362, 0.0
      %v1395 = vmax.f32 %v1363, 0.0
      %v1396 = vmax.f32 %v1364, 0.0
      %v1397 = vmax.f32 %v1365, 0.0
      %v1398 = vmax.f32 %v1366, 0.0
      %v1399 = vmax.f32 %v1367, 0.0
      %v1400 = vmax.f32 %v1368, 0.0
      %v1401 = vmax.f32 %v1369, 0.0
      %v1402 = vmax.f32 %v1370, 0.0
      %v1403 = vmax.f32 %v1371, 0.0
      %v1404 = vmax.f32 %v1372, 0.0
      %v1405 = vmax.f32 %v1373, 0.0
      %v1406 = vmax.f32 %v1374, 0.0
      %v1407 = vmax.f32 %v1375, 0.0
      %v1408 = vmax.f32 %v1376, 0.0
      %v1409 = vmax.f32 %v1377, 0.0
      %v1410 = vmax.f32 %v1378, 0.0
      %v1411 = vmax.f32 %v1379, 0.0
      %v1412 = vmax.f32 %v1380, 0.0
      %v1413 = vmax.f32 %v1381, 0.0
      %v1414 = vmax.f32 %v1382, 0.0
      %v1415 = vmax.f32 %v1383, 0.0
      %v1416 = vmax.f32 %v1384, 0.0
      %v1417 = vmax.f32 %v1385, 0.0
      %v1418 = vmax.f32 %v1386, 0.0
      %v1419 = vmax.f32 %v1387, 0.0
      %v1420 = vmax.f32 %v1388, 0.0
      %v1421 = vmax.f32 %v1389, 0.0
      %v1422 = vpack.c.bf16 %v1390, %v1390
      %v1423 = vpack.c.bf16 %v1391, %v1391
      %v1424 = vpack.c.bf16 %v1392, %v1392
      %v1425 = vpack.c.bf16 %v1393, %v1393
      %v1426 = vpack.c.bf16 %v1394, %v1394
      %v1427 = vpack.c.bf16 %v1395, %v1395
      %v1428 = vpack.c.bf16 %v1396, %v1396
      %v1429 = vpack.c.bf16 %v1397, %v1397
      %v1430 = vpack.c.bf16 %v1398, %v1398
      %v1431 = vpack.c.bf16 %v1399, %v1399
      %v1432 = vpack.c.bf16 %v1400, %v1400
      %v1433 = vpack.c.bf16 %v1401, %v1401
      %v1434 = vpack.c.bf16 %v1402, %v1402
      %v1435 = vpack.c.bf16 %v1403, %v1403
      %v1436 = vpack.c.bf16 %v1404, %v1404
      %v1437 = vpack.c.bf16 %v1405, %v1405
      %v1438 = vpack.c.bf16 %v1406, %v1406
      %v1439 = vpack.c.bf16 %v1407, %v1407
      %v1440 = vpack.c.bf16 %v1408, %v1408
      %v1441 = vpack.c.bf16 %v1409, %v1409
      %v1442 = vpack.c.bf16 %v1410, %v1410
      %v1443 = vpack.c.bf16 %v1411, %v1411
      %v1444 = vpack.c.bf16 %v1412, %v1412
      %v1445 = vpack.c.bf16 %v1413, %v1413
      %v1446 = vpack.c.bf16 %v1414, %v1414
      %v1447 = vpack.c.bf16 %v1415, %v1415
      %v1448 = vpack.c.bf16 %v1416, %v1416
      %v1449 = vpack.c.bf16 %v1417, %v1417
      %v1450 = vpack.c.bf16 %v1418, %v1418
      %v1451 = vpack.c.bf16 %v1419, %v1419
      %v1452 = vpack.c.bf16 %v1420, %v1420
      %v1453 = vpack.c.bf16 %v1421, %v1421
      %v1454 = vld [vmem:[%s3] sm:$0xf]
      %v1455 = vld [vmem:[%s3 + $0x4] sm:$0x3]
      %v1456 = vld [vmem:[%s3 + $0x8] sm:$0xf]
      %v1457 = vld [vmem:[%s3 + $0xc] sm:$0x3]
      %v1458 = vld [vmem:[%s3 + $0x10] sm:$0xf]
      %v1459 = vld [vmem:[%s3 + $0x14] sm:$0x3]
      %v1492 = vunpack.c.l.b16 %v1422
      %v1493 = vunpack.c.l.b16 %v1423
      %v1494 = vunpack.c.l.b16 %v1424
      %v1495 = vunpack.c.l.b16 %v1425
      %v1496 = vunpack.c.l.b16 %v1426
      %v1497 = vunpack.c.l.b16 %v1427
      %v1498 = vunpack.c.l.b16 %v1428
      %v1499 = vunpack.c.l.b16 %v1429
      %v1500 = vunpack.c.l.b16 %v1430
      %v1501 = vunpack.c.l.b16 %v1431
      %v1502 = vunpack.c.l.b16 %v1432
      %v1503 = vunpack.c.l.b16 %v1433
      %v1504 = vunpack.c.l.b16 %v1434
      %v1505 = vunpack.c.l.b16 %v1435
      %v1506 = vunpack.c.l.b16 %v1436
      %v1507 = vunpack.c.l.b16 %v1437
      %v1508 = vunpack.c.l.b16 %v1438
      %v1509 = vunpack.c.l.b16 %v1439
      %v1510 = vunpack.c.l.b16 %v1440
      %v1511 = vunpack.c.l.b16 %v1441
      %v1512 = vunpack.c.l.b16 %v1442
      %v1513 = vunpack.c.l.b16 %v1443
      %v1514 = vunpack.c.l.b16 %v1444
      %v1515 = vunpack.c.l.b16 %v1445
      %v1516 = vunpack.c.l.b16 %v1446
      %v1517 = vunpack.c.l.b16 %v1447
      %v1518 = vunpack.c.l.b16 %v1448
      %v1519 = vunpack.c.l.b16 %v1449
      %v1520 = vunpack.c.l.b16 %v1450
      %v1521 = vunpack.c.l.b16 %v1451
      %v1522 = vunpack.c.l.b16 %v1452
      %v1523 = vunpack.c.l.b16 %v1453
      %v1524 = vpack.c.b16 %v1493, %v1492
      %v1525 = vpack.c.b16 %v1495, %v1494
      %v1526 = vpack.c.b16 %v1497, %v1496
      %v1527 = vpack.c.b16 %v1499, %v1498
      %v1528 = vpack.c.b16 %v1501, %v1500
      %v1529 = vpack.c.b16 %v1503, %v1502
      %v1530 = vpack.c.b16 %v1505, %v1504
      %v1531 = vpack.c.b16 %v1507, %v1506
      %v1532 = vpack.c.b16 %v1509, %v1508
      %v1533 = vpack.c.b16 %v1511, %v1510
      %v1534 = vpack.c.b16 %v1513, %v1512
      %v1535 = vpack.c.b16 %v1515, %v1514
      %v1536 = vpack.c.b16 %v1517, %v1516
      %v1537 = vpack.c.b16 %v1519, %v1518
      %v1538 = vpack.c.b16 %v1521, %v1520
      %v1539 = vpack.c.b16 %v1523, %v1522
      %v1541 = vshrl.u32 %v1524, 16
      %v1543 = vrot.slane %v1541, 7
      %v1544 = vshll.u32 %v1524, 16
      %v1546 = vor.u32 %v1543, %v1544
      %v1548 = vshrl.u32 %v1525, 16
      %v1550 = vrot.slane %v1548, 7
      %v1551 = vshll.u32 %v1525, 16
      %v1553 = vor.u32 %v1550, %v1551
      %v1555 = vshrl.u32 %v1526, 16
      %v1557 = vrot.slane %v1555, 7
      %v1558 = vshll.u32 %v1526, 16
      %v1560 = vor.u32 %v1557, %v1558
      %v1562 = vshrl.u32 %v1527, 16
      %v1564 = vrot.slane %v1562, 7
      %v1565 = vshll.u32 %v1527, 16
      %v1567 = vor.u32 %v1564, %v1565
      %v1569 = vshrl.u32 %v1528, 16
      %v1571 = vrot.slane %v1569, 7
      %v1572 = vshll.u32 %v1528, 16
      %v1574 = vor.u32 %v1571, %v1572
      %v1576 = vshrl.u32 %v1529, 16
      %v1578 = vrot.slane %v1576, 7
      %v1579 = vshll.u32 %v1529, 16
      %v1581 = vor.u32 %v1578, %v1579
      %v1583 = vshrl.u32 %v1530, 16
      %v1585 = vrot.slane %v1583, 7
      %v1586 = vshll.u32 %v1530, 16
      %v1588 = vor.u32 %v1585, %v1586
      %v1590 = vshrl.u32 %v1531, 16
      %v1592 = vrot.slane %v1590, 7
      %v1593 = vshll.u32 %v1531, 16
      %v1595 = vor.u32 %v1592, %v1593
      %v1597 = vshrl.u32 %v1532, 16
      %v1599 = vrot.slane %v1597, 7
      %v1600 = vshll.u32 %v1532, 16
      %v1602 = vor.u32 %v1599, %v1600
      %v1604 = vshrl.u32 %v1533, 16
      %v1606 = vrot.slane %v1604, 7
      %v1607 = vshll.u32 %v1533, 16
      %v1609 = vor.u32 %v1606, %v1607
      %v1611 = vshrl.u32 %v1534, 16
      %v1613 = vrot.slane %v1611, 7
      %v1614 = vshll.u32 %v1534, 16
      %v1616 = vor.u32 %v1613, %v1614
      %v1618 = vshrl.u32 %v1535, 16
      %v1620 = vrot.slane %v1618, 7
      %v1621 = vshll.u32 %v1535, 16
      %v1623 = vor.u32 %v1620, %v1621
      %v1625 = vshrl.u32 %v1536, 16
      %v1627 = vrot.slane %v1625, 7
      %v1628 = vshll.u32 %v1536, 16
      %v1630 = vor.u32 %v1627, %v1628
      %v1632 = vshrl.u32 %v1537, 16
      %v1634 = vrot.slane %v1632, 7
      %v1635 = vshll.u32 %v1537, 16
      %v1637 = vor.u32 %v1634, %v1635
      %v1639 = vshrl.u32 %v1538, 16
      %v1641 = vrot.slane %v1639, 7
      %v1642 = vshll.u32 %v1538, 16
      %v1644 = vor.u32 %v1641, %v1642
      %v1646 = vshrl.u32 %v1539, 16
      %v1648 = vrot.slane %v1646, 7
      %v1649 = vshll.u32 %v1539, 16
      %v1651 = vor.u32 %v1648, %v1649
      %v1684 = vsel %vm531, 0, %v1546
      %v1685 = vsel %vm531, 0, %v1553
      %v1686 = vsel %vm531, 0, %v1560
      %v1687 = vsel %vm531, 0, %v1567
      %v1688 = vsel %vm531, 0, %v1574
      %v1689 = vsel %vm531, 0, %v1581
      %v1690 = vsel %vm531, 0, %v1588
      %v1691 = vsel %vm531, 0, %v1595
      %v1692 = vsel %vm531, 0, %v1602
      %v1693 = vsel %vm531, 0, %v1609
      %v1694 = vsel %vm531, 0, %v1616
      %v1695 = vsel %vm531, 0, %v1623
      %v1696 = vsel %vm531, 0, %v1630
      %v1697 = vsel %vm531, 0, %v1637
      %v1698 = vsel %vm531, 0, %v1644
      %v1699 = vsel %vm531, 0, %v1651
      %v1700 = vsel %vm531, %v1543, 0
      %v1701 = vsel %vm531, %v1550, 0
      %v1702 = vsel %vm531, %v1557, 0
      %v1703 = vsel %vm531, %v1564, 0
      %v1704 = vsel %vm531, %v1571, 0
      %v1705 = vsel %vm531, %v1578, 0
      %v1706 = vsel %vm531, %v1585, 0
      %v1707 = vsel %vm531, %v1592, 0
      %v1708 = vsel %vm531, %v1599, 0
      %v1709 = vsel %vm531, %v1606, 0
      %v1710 = vsel %vm531, %v1613, 0
      %v1711 = vsel %vm531, %v1620, 0
      %v1712 = vsel %vm531, %v1627, 0
      %v1713 = vsel %vm531, %v1634, 0
      %v1714 = vsel %vm531, %v1641, 0
      %v1715 = vsel %vm531, %v1648, 0
      %v1717 = vshrl.u32 %v1684, 16
      %v1719 = vshll.u32 %v1684, 16
      %v1721 = vrot.slane %v1719, 1
      %v1722 = vor.u32 %v1717, %v1721
      %v1724 = vshll.u32 %v1700, 16
      %v1726 = vrot.slane %v1724, 1
      %v1727 = vsel %vm566, %v1722, %v1726
      %v1729 = vshrl.u32 %v1685, 16
      %v1731 = vshll.u32 %v1685, 16
      %v1733 = vrot.slane %v1731, 1
      %v1734 = vor.u32 %v1729, %v1733
      %v1736 = vshll.u32 %v1701, 16
      %v1738 = vrot.slane %v1736, 1
      %v1739 = vsel %vm566, %v1734, %v1738
      %v1741 = vshrl.u32 %v1686, 16
      %v1743 = vshll.u32 %v1686, 16
      %v1745 = vrot.slane %v1743, 1
      %v1746 = vor.u32 %v1741, %v1745
      %v1748 = vshll.u32 %v1702, 16
      %v1750 = vrot.slane %v1748, 1
      %v1751 = vsel %vm566, %v1746, %v1750
      %v1753 = vshrl.u32 %v1687, 16
      %v1755 = vshll.u32 %v1687, 16
      %v1757 = vrot.slane %v1755, 1
      %v1758 = vor.u32 %v1753, %v1757
      %v1760 = vshll.u32 %v1703, 16
      %v1762 = vrot.slane %v1760, 1
      %v1763 = vsel %vm566, %v1758, %v1762
      %v1765 = vshrl.u32 %v1688, 16
      %v1767 = vshll.u32 %v1688, 16
      %v1769 = vrot.slane %v1767, 1
      %v1770 = vor.u32 %v1765, %v1769
      %v1772 = vshll.u32 %v1704, 16
      %v1774 = vrot.slane %v1772, 1
      %v1775 = vsel %vm566, %v1770, %v1774
      %v1777 = vshrl.u32 %v1689, 16
      %v1779 = vshll.u32 %v1689, 16
      %v1781 = vrot.slane %v1779, 1
      %v1782 = vor.u32 %v1777, %v1781
      %v1784 = vshll.u32 %v1705, 16
      %v1786 = vrot.slane %v1784, 1
      %v1787 = vsel %vm566, %v1782, %v1786
      %v1789 = vshrl.u32 %v1690, 16
      %v1791 = vshll.u32 %v1690, 16
      %v1793 = vrot.slane %v1791, 1
      %v1794 = vor.u32 %v1789, %v1793
      %v1796 = vshll.u32 %v1706, 16
      %v1798 = vrot.slane %v1796, 1
      %v1799 = vsel %vm566, %v1794, %v1798
      %v1801 = vshrl.u32 %v1691, 16
      %v1803 = vshll.u32 %v1691, 16
      %v1805 = vrot.slane %v1803, 1
      %v1806 = vor.u32 %v1801, %v1805
      %v1808 = vshll.u32 %v1707, 16
      %v1810 = vrot.slane %v1808, 1
      %v1811 = vsel %vm566, %v1806, %v1810
      %v1813 = vshrl.u32 %v1692, 16
      %v1815 = vshll.u32 %v1692, 16
      %v1817 = vrot.slane %v1815, 1
      %v1818 = vor.u32 %v1813, %v1817
      %v1820 = vshll.u32 %v1708, 16
      %v1822 = vrot.slane %v1820, 1
      %v1823 = vsel %vm566, %v1818, %v1822
      %v1825 = vshrl.u32 %v1693, 16
      %v1827 = vshll.u32 %v1693, 16
      %v1829 = vrot.slane %v1827, 1
      %v1830 = vor.u32 %v1825, %v1829
      %v1832 = vshll.u32 %v1709, 16
      %v1834 = vrot.slane %v1832, 1
      %v1835 = vsel %vm566, %v1830, %v1834
      %v1837 = vshrl.u32 %v1694, 16
      %v1839 = vshll.u32 %v1694, 16
      %v1841 = vrot.slane %v1839, 1
      %v1842 = vor.u32 %v1837, %v1841
      %v1844 = vshll.u32 %v1710, 16
      %v1846 = vrot.slane %v1844, 1
      %v1847 = vsel %vm566, %v1842, %v1846
      %v1849 = vshrl.u32 %v1695, 16
      %v1851 = vshll.u32 %v1695, 16
      %v1853 = vrot.slane %v1851, 1
      %v1854 = vor.u32 %v1849, %v1853
      %v1856 = vshll.u32 %v1711, 16
      %v1858 = vrot.slane %v1856, 1
      %v1859 = vsel %vm566, %v1854, %v1858
      %v1861 = vshrl.u32 %v1696, 16
      %v1863 = vshll.u32 %v1696, 16
      %v1865 = vrot.slane %v1863, 1
      %v1866 = vor.u32 %v1861, %v1865
      %v1868 = vshll.u32 %v1712, 16
      %v1870 = vrot.slane %v1868, 1
      %v1871 = vsel %vm566, %v1866, %v1870
      %v1873 = vshrl.u32 %v1697, 16
      %v1875 = vshll.u32 %v1697, 16
      %v1877 = vrot.slane %v1875, 1
      %v1878 = vor.u32 %v1873, %v1877
      %v1880 = vshll.u32 %v1713, 16
      %v1882 = vrot.slane %v1880, 1
      %v1883 = vsel %vm566, %v1878, %v1882
      %v1885 = vshrl.u32 %v1698, 16
      %v1887 = vshll.u32 %v1698, 16
      %v1889 = vrot.slane %v1887, 1
      %v1890 = vor.u32 %v1885, %v1889
      %v1892 = vshll.u32 %v1714, 16
      %v1894 = vrot.slane %v1892, 1
      %v1895 = vsel %vm566, %v1890, %v1894
      %1896 = vrot.lane.b32.xlu0 %v1727, 4
      %v1897 = vpop.permute.xlu0 %1896
      %1898 = vrot.lane.b32.xlu0 %v1739, 4
      %v1899 = vpop.permute.xlu0 %1898
      %1900 = vrot.lane.b32.xlu0 %v1751, 4
      %v1901 = vpop.permute.xlu0 %1900
      %1902 = vrot.lane.b32.xlu0 %v1763, 4
      %v1903 = vpop.permute.xlu0 %1902
      %1904 = vrot.lane.b32.xlu0 %v1775, 4
      %v1905 = vpop.permute.xlu0 %1904
      %1906 = vrot.lane.b32.xlu0 %v1787, 4
      %v1907 = vpop.permute.xlu0 %1906
      %1908 = vrot.lane.b32.xlu0 %v1799, 4
      %v1909 = vpop.permute.xlu0 %1908
      %1910 = vrot.lane.b32.xlu0 %v1811, 4
      %v1911 = vpop.permute.xlu0 %1910
      %1912 = vrot.lane.b32.xlu0 %v1823, 4
      %v1913 = vpop.permute.xlu0 %1912
      %1914 = vrot.lane.b32.xlu0 %v1835, 4
      %v1915 = vpop.permute.xlu0 %1914
      %1916 = vrot.lane.b32.xlu0 %v1847, 4
      %v1917 = vpop.permute.xlu0 %1916
      %1918 = vrot.lane.b32.xlu0 %v1859, 4
      %v1919 = vpop.permute.xlu0 %1918
      %1920 = vrot.lane.b32.xlu0 %v1871, 4
      %v1921 = vpop.permute.xlu0 %1920
      %1922 = vrot.lane.b32.xlu0 %v1883, 4
      %v1923 = vpop.permute.xlu0 %1922
      %1924 = vrot.lane.b32.xlu0 %v1895, 4
      %v1925 = vpop.permute.xlu0 %1924
      %v1956 = vrot.slane %v1684, 1
      %v1957 = vrot.slane %v1700, 1
      %v1958 = vsel %vm823, %v1956, %v1957
      %v1959 = vrot.slane %v1685, 1
      %v1960 = vrot.slane %v1701, 1
      %v1961 = vsel %vm823, %v1959, %v1960
      %v1962 = vrot.slane %v1686, 1
      %v1963 = vrot.slane %v1702, 1
      %v1964 = vsel %vm823, %v1962, %v1963
      %v1965 = vrot.slane %v1687, 1
      %v1966 = vrot.slane %v1703, 1
      %v1967 = vsel %vm823, %v1965, %v1966
      %v1968 = vrot.slane %v1688, 1
      %v1969 = vrot.slane %v1704, 1
      %v1970 = vsel %vm823, %v1968, %v1969
      %v1971 = vrot.slane %v1689, 1
      %v1972 = vrot.slane %v1705, 1
      %v1973 = vsel %vm823, %v1971, %v1972
      %v1974 = vrot.slane %v1690, 1
      %v1975 = vrot.slane %v1706, 1
      %v1976 = vsel %vm823, %v1974, %v1975
      %v1977 = vrot.slane %v1691, 1
      %v1978 = vrot.slane %v1707, 1
      %v1979 = vsel %vm823, %v1977, %v1978
      %v1980 = vrot.slane %v1692, 1
      %v1981 = vrot.slane %v1708, 1
      %v1982 = vsel %vm823, %v1980, %v1981
      %v1983 = vrot.slane %v1693, 1
      %v1984 = vrot.slane %v1709, 1
      %v1985 = vsel %vm823, %v1983, %v1984
      %v1986 = vrot.slane %v1694, 1
      %v1987 = vrot.slane %v1710, 1
      %v1988 = vsel %vm823, %v1986, %v1987
      %v1989 = vrot.slane %v1695, 1
      %v1990 = vrot.slane %v1711, 1
      %v1991 = vsel %vm823, %v1989, %v1990
      %v1992 = vrot.slane %v1696, 1
      %v1993 = vrot.slane %v1712, 1
      %v1994 = vsel %vm823, %v1992, %v1993
      %v1995 = vrot.slane %v1697, 1
      %v1996 = vrot.slane %v1713, 1
      %v1997 = vsel %vm823, %v1995, %v1996
      %v1998 = vrot.slane %v1698, 1
      %v1999 = vrot.slane %v1714, 1
      %v2000 = vsel %vm823, %v1998, %v1999
      %2001 = vrot.lane.b32.xlu0 %v1958, 8
      %v2002 = vpop.permute.xlu0 %2001
      %2003 = vrot.lane.b32.xlu0 %v1961, 8
      %v2004 = vpop.permute.xlu0 %2003
      %2005 = vrot.lane.b32.xlu0 %v1964, 8
      %v2006 = vpop.permute.xlu0 %2005
      %2007 = vrot.lane.b32.xlu0 %v1967, 8
      %v2008 = vpop.permute.xlu0 %2007
      %2009 = vrot.lane.b32.xlu0 %v1970, 8
      %v2010 = vpop.permute.xlu0 %2009
      %2011 = vrot.lane.b32.xlu0 %v1973, 8
      %v2012 = vpop.permute.xlu0 %2011
      %2013 = vrot.lane.b32.xlu0 %v1976, 8
      %v2014 = vpop.permute.xlu0 %2013
      %2015 = vrot.lane.b32.xlu0 %v1979, 8
      %v2016 = vpop.permute.xlu0 %2015
      %2017 = vrot.lane.b32.xlu0 %v1982, 8
      %v2018 = vpop.permute.xlu0 %2017
      %2019 = vrot.lane.b32.xlu0 %v1985, 8
      %v2020 = vpop.permute.xlu0 %2019
      %2021 = vrot.lane.b32.xlu0 %v1988, 8
      %v2022 = vpop.permute.xlu0 %2021
      %2023 = vrot.lane.b32.xlu0 %v1991, 8
      %v2024 = vpop.permute.xlu0 %2023
      %2025 = vrot.lane.b32.xlu0 %v1994, 8
      %v2026 = vpop.permute.xlu0 %2025
      %2027 = vrot.lane.b32.xlu0 %v1997, 8
      %v2028 = vpop.permute.xlu0 %2027
      %2029 = vrot.lane.b32.xlu0 %v2000, 8
      %v2030 = vpop.permute.xlu0 %2029
      %v2032 = vsel %vm904, %v1684, %v1897
      %v2034 = vsel %vm904, %v1685, %v1899
      %v2036 = vsel %vm904, %v1686, %v1901
      %v2038 = vsel %vm904, %v1687, %v1903
      %v2040 = vsel %vm904, %v1688, %v1905
      %v2042 = vsel %vm904, %v1689, %v1907
      %v2044 = vsel %vm904, %v1690, %v1909
      %v2046 = vsel %vm904, %v1691, %v1911
      %v2048 = vsel %vm904, %v1692, %v1913
      %v2050 = vsel %vm904, %v1693, %v1915
      %v2052 = vsel %vm904, %v1694, %v1917
      %v2054 = vsel %vm904, %v1695, %v1919
      %v2056 = vsel %vm904, %v1696, %v1921
      %v2058 = vsel %vm904, %v1697, %v1923
      %v2060 = vsel %vm904, %v1698, %v1925
      %v2062 = vsel %vm937, %v2032, %v2002
      %v2064 = vsel %vm937, %v2034, %v2004
      %v2066 = vsel %vm937, %v2036, %v2006
      %v2068 = vsel %vm937, %v2038, %v2008
      %v2070 = vsel %vm937, %v2040, %v2010
      %v2072 = vsel %vm937, %v2042, %v2012
      %v2074 = vsel %vm937, %v2044, %v2014
      %v2076 = vsel %vm937, %v2046, %v2016
      %v2078 = vsel %vm937, %v2048, %v2018
      %v2080 = vsel %vm937, %v2050, %v2020
      %v2082 = vsel %vm937, %v2052, %v2022
      %v2084 = vsel %vm937, %v2054, %v2024
      %v2086 = vsel %vm937, %v2056, %v2026
      %v2088 = vsel %vm937, %v2058, %v2028
      %v2090 = vsel %vm937, %v2060, %v2030
      %v2092 = vshrl.u32 %v1699, 16
      %v2094 = vshll.u32 %v1699, 16
      %v2096 = vrot.slane %v2094, 1
      %v2097 = vor.u32 %v2092, %v2096
      %v2099 = vshll.u32 %v1715, 16
      %v2101 = vrot.slane %v2099, 1
      %v2102 = vsel %vm566, %v2097, %v2101
      %2103 = vrot.lane.b32.xlu0 %v2102, 4
      %v2104 = vpop.permute.xlu0 %2103
      %v2107 = vrot.slane %v1699, 1
      %v2108 = vrot.slane %v1715, 1
      %v2109 = vsel %vm823, %v2107, %v2108
      %2110 = vrot.lane.b32.xlu0 %v2109, 8
      %v2111 = vpop.permute.xlu0 %2110
      %v2113 = vsel %vm904, %v1699, %v2104
      %v2115 = vsel %vm937, %v2113, %v2111
      %v2118 = vunpack.c.l.b16 %v1456
      %v2119 = vunpack.c.l.b16 %v1457
      %v2120 = vpack.c.b16 %v2119, %v2118
      %v2121 = vsel %vm1000, %v2062, 0
      %v2123 = vsel %vm1000, %v2064, 0
      %v2125 = vsel %vm1000, %v2066, 0
      %v2127 = vsel %vm1000, %v2068, 0
      %v2129 = vsel %vm1000, %v2070, 0
      %v2131 = vsel %vm1000, %v2072, 0
      %v2133 = vsel %vm1000, %v2074, 0
      %v2135 = vsel %vm1000, %v2076, 0
      %v2137 = vsel %vm1000, %v2078, 0
      %v2139 = vsel %vm1000, %v2080, 0
      %v2141 = vsel %vm1000, %v2082, 0
      %v2143 = vsel %vm1000, %v2084, 0
      %v2145 = vsel %vm1000, %v2086, 0
      %v2147 = vsel %vm1000, %v2088, 0
      %v2149 = vsel %vm1000, %v2090, 0
      %v2151 = vsel %vm1000, %v2115, 0
      %v2154 = vsel %vm1033, %v2120, 0
      %2156 = vmatpush.bf16.msra.mxu0 0
      %2157 = vmatpush.bf16.msra.mxu0 0
      %2158 = vmatpush.bf16.msra.mxu0 0
      %2159 = vmatpush.bf16.msra.mxu0 0
      %2160 = vmatpush.bf16.msra.mxu0 0
      %2161 = vmatpush.bf16.msra.mxu0 0
      %2162 = vmatpush.bf16.msra.mxu0 0
      %2163 = vmatpush.bf16.msra.mxu0 %v2154
      %2164 = vmatmul.bf16.gmra.mxu0 %v2121
      %v2165 = vpop.f32.mrf.mxu0
      %v2166 = vadd.f32 0.0, %v2165
      %v2167 = vpop.f32.mrf.mxu0
      %v2168 = vadd.f32 0.0, %v2167
      %2169 = vmatmul.bf16.gmra.mxu0 %v2123
      %v2170 = vpop.f32.mrf.mxu0
      %v2171 = vadd.f32 0.0, %v2170
      %v2172 = vpop.f32.mrf.mxu0
      %v2173 = vadd.f32 0.0, %v2172
      %2174 = vmatmul.bf16.gmra.mxu0 %v2125
      %v2175 = vpop.f32.mrf.mxu0
      %v2176 = vadd.f32 0.0, %v2175
      %v2177 = vpop.f32.mrf.mxu0
      %v2178 = vadd.f32 0.0, %v2177
      %2179 = vmatmul.bf16.gmra.mxu0 %v2127
      %v2180 = vpop.f32.mrf.mxu0
      %v2181 = vadd.f32 0.0, %v2180
      %v2182 = vpop.f32.mrf.mxu0
      %v2183 = vadd.f32 0.0, %v2182
      %2184 = vmatmul.bf16.gmra.mxu0 %v2129
      %v2185 = vpop.f32.mrf.mxu0
      %v2186 = vadd.f32 0.0, %v2185
      %v2187 = vpop.f32.mrf.mxu0
      %v2188 = vadd.f32 0.0, %v2187
      %2189 = vmatmul.bf16.gmra.mxu0 %v2131
      %v2190 = vpop.f32.mrf.mxu0
      %v2191 = vadd.f32 0.0, %v2190
      %v2192 = vpop.f32.mrf.mxu0
      %v2193 = vadd.f32 0.0, %v2192
      %2194 = vmatmul.bf16.gmra.mxu0 %v2133
      %v2195 = vpop.f32.mrf.mxu0
      %v2196 = vadd.f32 0.0, %v2195
      %v2197 = vpop.f32.mrf.mxu0
      %v2198 = vadd.f32 0.0, %v2197
      %2199 = vmatmul.bf16.gmra.mxu0 %v2135
      %v2200 = vpop.f32.mrf.mxu0
      %v2201 = vadd.f32 0.0, %v2200
      %v2202 = vpop.f32.mrf.mxu0
      %v2203 = vadd.f32 0.0, %v2202
      %2204 = vmatmul.bf16.gmra.mxu0 %v2137
      %v2205 = vpop.f32.mrf.mxu0
      %v2206 = vadd.f32 0.0, %v2205
      %v2207 = vpop.f32.mrf.mxu0
      %v2208 = vadd.f32 0.0, %v2207
      %2209 = vmatmul.bf16.gmra.mxu0 %v2139
      %v2210 = vpop.f32.mrf.mxu0
      %v2211 = vadd.f32 0.0, %v2210
      %v2212 = vpop.f32.mrf.mxu0
      %v2213 = vadd.f32 0.0, %v2212
      %2214 = vmatmul.bf16.gmra.mxu0 %v2141
      %v2215 = vpop.f32.mrf.mxu0
      %v2216 = vadd.f32 0.0, %v2215
      %v2217 = vpop.f32.mrf.mxu0
      %v2218 = vadd.f32 0.0, %v2217
      %2219 = vmatmul.bf16.gmra.mxu0 %v2143
      %v2220 = vpop.f32.mrf.mxu0
      %v2221 = vadd.f32 0.0, %v2220
      %v2222 = vpop.f32.mrf.mxu0
      %v2223 = vadd.f32 0.0, %v2222
      %2224 = vmatmul.bf16.gmra.mxu0 %v2145
      %v2225 = vpop.f32.mrf.mxu0
      %v2226 = vadd.f32 0.0, %v2225
      %v2227 = vpop.f32.mrf.mxu0
      %v2228 = vadd.f32 0.0, %v2227
      %2229 = vmatmul.bf16.gmra.mxu0 %v2147
      %v2230 = vpop.f32.mrf.mxu0
      %v2231 = vadd.f32 0.0, %v2230
      %v2232 = vpop.f32.mrf.mxu0
      %v2233 = vadd.f32 0.0, %v2232
      %2234 = vmatmul.bf16.gmra.mxu0 %v2149
      %v2235 = vpop.f32.mrf.mxu0
      %v2236 = vadd.f32 0.0, %v2235
      %v2237 = vpop.f32.mrf.mxu0
      %v2238 = vadd.f32 0.0, %v2237
      %2239 = vmatmul.bf16.gmra.mxu0 %v2151
      %v2240 = vpop.f32.mrf.mxu0
      %v2241 = vadd.f32 0.0, %v2240
      %v2242 = vpop.f32.mrf.mxu0
      %v2243 = vadd.f32 0.0, %v2242
      %2244 = vdwg.mxu0
      %v2247 = vunpack.c.l.b16 %v1454
      %v2248 = vunpack.c.l.b16 %v1455
      %v2249 = vpack.c.b16 %v2248, %v2247
      %v2251 = vsel %vm1033, %v2249, 0
      %2253 = vmatpush.bf16.msra.mxu0 0
      %2254 = vmatpush.bf16.msra.mxu0 0
      %2255 = vmatpush.bf16.msra.mxu0 0
      %2256 = vmatpush.bf16.msra.mxu0 0
      %2257 = vmatpush.bf16.msra.mxu0 0
      %2258 = vmatpush.bf16.msra.mxu0 0
      %2259 = vmatpush.bf16.msra.mxu0 0
      %2260 = vmatpush.bf16.msra.mxu0 %v2251
      %2261 = vmatmul.bf16.gmra.mxu0 %v1131
      %v2262 = vpop.f32.mrf.mxu0
      %v2263 = vadd.f32 %v2166, %v2262
      %v2264 = vpop.f32.mrf.mxu0
      %v2265 = vadd.f32 %v2168, %v2264
      %2266 = vmatmul.bf16.gmra.mxu0 %v2121
      %v2267 = vpop.f32.mrf.mxu0
      %v2268 = vadd.f32 %v2171, %v2267
      %v2269 = vpop.f32.mrf.mxu0
      %v2270 = vadd.f32 %v2173, %v2269
      %2271 = vmatmul.bf16.gmra.mxu0 %v2123
      %v2272 = vpop.f32.mrf.mxu0
      %v2273 = vadd.f32 %v2176, %v2272
      %v2274 = vpop.f32.mrf.mxu0
      %v2275 = vadd.f32 %v2178, %v2274
      %2276 = vmatmul.bf16.gmra.mxu0 %v2125
      %v2277 = vpop.f32.mrf.mxu0
      %v2278 = vadd.f32 %v2181, %v2277
      %v2279 = vpop.f32.mrf.mxu0
      %v2280 = vadd.f32 %v2183, %v2279
      %2281 = vmatmul.bf16.gmra.mxu0 %v2127
      %v2282 = vpop.f32.mrf.mxu0
      %v2283 = vadd.f32 %v2186, %v2282
      %v2284 = vpop.f32.mrf.mxu0
      %v2285 = vadd.f32 %v2188, %v2284
      %2286 = vmatmul.bf16.gmra.mxu0 %v2129
      %v2287 = vpop.f32.mrf.mxu0
      %v2288 = vadd.f32 %v2191, %v2287
      %v2289 = vpop.f32.mrf.mxu0
      %v2290 = vadd.f32 %v2193, %v2289
      %2291 = vmatmul.bf16.gmra.mxu0 %v2131
      %v2292 = vpop.f32.mrf.mxu0
      %v2293 = vadd.f32 %v2196, %v2292
      %v2294 = vpop.f32.mrf.mxu0
      %v2295 = vadd.f32 %v2198, %v2294
      %2296 = vmatmul.bf16.gmra.mxu0 %v2133
      %v2297 = vpop.f32.mrf.mxu0
      %v2298 = vadd.f32 %v2201, %v2297
      %v2299 = vpop.f32.mrf.mxu0
      %v2300 = vadd.f32 %v2203, %v2299
      %2301 = vmatmul.bf16.gmra.mxu0 %v2135
      %v2302 = vpop.f32.mrf.mxu0
      %v2303 = vadd.f32 %v2206, %v2302
      %v2304 = vpop.f32.mrf.mxu0
      %v2305 = vadd.f32 %v2208, %v2304
      %2306 = vmatmul.bf16.gmra.mxu0 %v2137
      %v2307 = vpop.f32.mrf.mxu0
      %v2308 = vadd.f32 %v2211, %v2307
      %v2309 = vpop.f32.mrf.mxu0
      %v2310 = vadd.f32 %v2213, %v2309
      %2311 = vmatmul.bf16.gmra.mxu0 %v2139
      %v2312 = vpop.f32.mrf.mxu0
      %v2313 = vadd.f32 %v2216, %v2312
      %v2314 = vpop.f32.mrf.mxu0
      %v2315 = vadd.f32 %v2218, %v2314
      %2316 = vmatmul.bf16.gmra.mxu0 %v2141
      %v2317 = vpop.f32.mrf.mxu0
      %v2318 = vadd.f32 %v2221, %v2317
      %v2319 = vpop.f32.mrf.mxu0
      %v2320 = vadd.f32 %v2223, %v2319
      %2321 = vmatmul.bf16.gmra.mxu0 %v2143
      %v2322 = vpop.f32.mrf.mxu0
      %v2323 = vadd.f32 %v2226, %v2322
      %v2324 = vpop.f32.mrf.mxu0
      %v2325 = vadd.f32 %v2228, %v2324
      %2326 = vmatmul.bf16.gmra.mxu0 %v2145
      %v2327 = vpop.f32.mrf.mxu0
      %v2328 = vadd.f32 %v2231, %v2327
      %v2329 = vpop.f32.mrf.mxu0
      %v2330 = vadd.f32 %v2233, %v2329
      %2331 = vmatmul.bf16.gmra.mxu0 %v2147
      %v2332 = vpop.f32.mrf.mxu0
      %v2333 = vadd.f32 %v2236, %v2332
      %v2334 = vpop.f32.mrf.mxu0
      %v2335 = vadd.f32 %v2238, %v2334
      %2336 = vmatmul.bf16.gmra.mxu0 %v2149
      %v2337 = vpop.f32.mrf.mxu0
      %v2338 = vadd.f32 %v2241, %v2337
      %v2339 = vpop.f32.mrf.mxu0
      %v2340 = vadd.f32 %v2243, %v2339
      %2341 = vdwg.mxu0
      %v2344 = vunpack.c.l.b16 %v1458
      %v2345 = vunpack.c.l.b16 %v1459
      %v2346 = vpack.c.b16 %v2345, %v2344
      %v2348 = vsel %vm1033, %v2346, 0
      %2350 = vmatpush.bf16.msra.mxu0 0
      %2351 = vmatpush.bf16.msra.mxu0 0
      %2352 = vmatpush.bf16.msra.mxu0 0
      %2353 = vmatpush.bf16.msra.mxu0 0
      %2354 = vmatpush.bf16.msra.mxu0 0
      %2355 = vmatpush.bf16.msra.mxu0 0
      %2356 = vmatpush.bf16.msra.mxu0 0
      %2357 = vmatpush.bf16.msra.mxu0 %v2348
      %2358 = vmatmul.bf16.gmra.mxu0 %v2123
      %v2359 = vpop.f32.mrf.mxu0
      %v2360 = vadd.f32 0.0, %v2359
      %v2361 = vpop.f32.mrf.mxu0
      %v2362 = vadd.f32 0.0, %v2361
      %2363 = vmatmul.bf16.gmra.mxu0 %v2125
      %v2364 = vpop.f32.mrf.mxu0
      %v2365 = vadd.f32 0.0, %v2364
      %v2366 = vpop.f32.mrf.mxu0
      %v2367 = vadd.f32 0.0, %v2366
      %2368 = vmatmul.bf16.gmra.mxu0 %v2127
      %v2369 = vpop.f32.mrf.mxu0
      %v2370 = vadd.f32 0.0, %v2369
      %v2371 = vpop.f32.mrf.mxu0
      %v2372 = vadd.f32 0.0, %v2371
      %2373 = vmatmul.bf16.gmra.mxu0 %v2129
      %v2374 = vpop.f32.mrf.mxu0
      %v2375 = vadd.f32 0.0, %v2374
      %v2376 = vpop.f32.mrf.mxu0
      %v2377 = vadd.f32 0.0, %v2376
      %2378 = vmatmul.bf16.gmra.mxu0 %v2131
      %v2379 = vpop.f32.mrf.mxu0
      %v2380 = vadd.f32 0.0, %v2379
      %v2381 = vpop.f32.mrf.mxu0
      %v2382 = vadd.f32 0.0, %v2381
      %2383 = vmatmul.bf16.gmra.mxu0 %v2133
      %v2384 = vpop.f32.mrf.mxu0
      %v2385 = vadd.f32 0.0, %v2384
      %v2386 = vpop.f32.mrf.mxu0
      %v2387 = vadd.f32 0.0, %v2386
      %2388 = vmatmul.bf16.gmra.mxu0 %v2135
      %v2389 = vpop.f32.mrf.mxu0
      %v2390 = vadd.f32 0.0, %v2389
      %v2391 = vpop.f32.mrf.mxu0
      %v2392 = vadd.f32 0.0, %v2391
      %2393 = vmatmul.bf16.gmra.mxu0 %v2137
      %v2394 = vpop.f32.mrf.mxu0
      %v2395 = vadd.f32 0.0, %v2394
      %v2396 = vpop.f32.mrf.mxu0
      %v2397 = vadd.f32 0.0, %v2396
      %2398 = vmatmul.bf16.gmra.mxu0 %v2139
      %v2399 = vpop.f32.mrf.mxu0
      %v2400 = vadd.f32 0.0, %v2399
      %v2401 = vpop.f32.mrf.mxu0
      %v2402 = vadd.f32 0.0, %v2401
      %2403 = vmatmul.bf16.gmra.mxu0 %v2141
      %v2404 = vpop.f32.mrf.mxu0
      %v2405 = vadd.f32 0.0, %v2404
      %v2406 = vpop.f32.mrf.mxu0
      %v2407 = vadd.f32 0.0, %v2406
      %2408 = vmatmul.bf16.gmra.mxu0 %v2143
      %v2409 = vpop.f32.mrf.mxu0
      %v2410 = vadd.f32 0.0, %v2409
      %v2411 = vpop.f32.mrf.mxu0
      %v2412 = vadd.f32 0.0, %v2411
      %2413 = vmatmul.bf16.gmra.mxu0 %v2145
      %v2414 = vpop.f32.mrf.mxu0
      %v2415 = vadd.f32 0.0, %v2414
      %v2416 = vpop.f32.mrf.mxu0
      %v2417 = vadd.f32 0.0, %v2416
      %2418 = vmatmul.bf16.gmra.mxu0 %v2147
      %v2419 = vpop.f32.mrf.mxu0
      %v2420 = vadd.f32 0.0, %v2419
      %v2421 = vpop.f32.mrf.mxu0
      %v2422 = vadd.f32 0.0, %v2421
      %2423 = vmatmul.bf16.gmra.mxu0 %v2149
      %v2424 = vpop.f32.mrf.mxu0
      %v2425 = vadd.f32 0.0, %v2424
      %v2426 = vpop.f32.mrf.mxu0
      %v2427 = vadd.f32 0.0, %v2426
      %2428 = vmatmul.bf16.gmra.mxu0 %v2151
      %v2429 = vpop.f32.mrf.mxu0
      %v2430 = vadd.f32 0.0, %v2429
      %v2431 = vpop.f32.mrf.mxu0
      %v2432 = vadd.f32 0.0, %v2431
      %2433 = vmatmul.bf16.gmra.mxu0 %v1131
      %v2434 = vpop.f32.mrf.mxu0
      %v2435 = vadd.f32 0.0, %v2434
      %v2436 = vpop.f32.mrf.mxu0
      %v2437 = vadd.f32 0.0, %v2436
      %2438 = vdwg.mxu0
      %v2439 = vadd.f32 %v2263, %v2360
      %v2440 = vadd.f32 %v2265, %v2362
      %v2441 = vadd.f32 %v2268, %v2365
      %v2442 = vadd.f32 %v2270, %v2367
      %v2443 = vadd.f32 %v2273, %v2370
      %v2444 = vadd.f32 %v2275, %v2372
      %v2445 = vadd.f32 %v2278, %v2375
      %v2446 = vadd.f32 %v2280, %v2377
      %v2447 = vadd.f32 %v2283, %v2380
      %v2448 = vadd.f32 %v2285, %v2382
      %v2449 = vadd.f32 %v2288, %v2385
      %v2450 = vadd.f32 %v2290, %v2387
      %v2451 = vadd.f32 %v2293, %v2390
      %v2452 = vadd.f32 %v2295, %v2392
      %v2453 = vadd.f32 %v2298, %v2395
      %v2454 = vadd.f32 %v2300, %v2397
      %v2455 = vadd.f32 %v2303, %v2400
      %v2456 = vadd.f32 %v2305, %v2402
      %v2457 = vadd.f32 %v2308, %v2405
      %v2458 = vadd.f32 %v2310, %v2407
      %v2459 = vadd.f32 %v2313, %v2410
      %v2460 = vadd.f32 %v2315, %v2412
      %v2461 = vadd.f32 %v2318, %v2415
      %v2462 = vadd.f32 %v2320, %v2417
      %v2463 = vadd.f32 %v2323, %v2420
      %v2464 = vadd.f32 %v2325, %v2422
      %v2465 = vadd.f32 %v2328, %v2425
      %v2466 = vadd.f32 %v2330, %v2427
      %v2467 = vadd.f32 %v2333, %v2430
      %v2468 = vadd.f32 %v2335, %v2432
      %v2469 = vadd.f32 %v2338, %v2435
      %v2470 = vadd.f32 %v2340, %v2437
      %v2471 = vld [vmem:[%s4] sm:$0x1]
      %v2473 = vperm.slane %v2471, 0
      %v2475 = vadd.f32 %v2439, %v2473
      %v2476 = vadd.f32 %v2440, %v2473
      %v2477 = vadd.f32 %v2441, %v2473
      %v2478 = vadd.f32 %v2442, %v2473
      %v2479 = vadd.f32 %v2443, %v2473
      %v2480 = vadd.f32 %v2444, %v2473
      %v2481 = vadd.f32 %v2445, %v2473
      %v2482 = vadd.f32 %v2446, %v2473
      %v2483 = vadd.f32 %v2447, %v2473
      %v2484 = vadd.f32 %v2448, %v2473
      %v2485 = vadd.f32 %v2449, %v2473
      %v2486 = vadd.f32 %v2450, %v2473
      %v2487 = vadd.f32 %v2451, %v2473
      %v2488 = vadd.f32 %v2452, %v2473
      %v2489 = vadd.f32 %v2453, %v2473
      %v2490 = vadd.f32 %v2454, %v2473
      %v2491 = vadd.f32 %v2455, %v2473
      %v2492 = vadd.f32 %v2456, %v2473
      %v2493 = vadd.f32 %v2457, %v2473
      %v2494 = vadd.f32 %v2458, %v2473
      %v2495 = vadd.f32 %v2459, %v2473
      %v2496 = vadd.f32 %v2460, %v2473
      %v2497 = vadd.f32 %v2461, %v2473
      %v2498 = vadd.f32 %v2462, %v2473
      %v2499 = vadd.f32 %v2463, %v2473
      %v2500 = vadd.f32 %v2464, %v2473
      %v2501 = vadd.f32 %v2465, %v2473
      %v2502 = vadd.f32 %v2466, %v2473
      %v2503 = vadd.f32 %v2467, %v2473
      %v2504 = vadd.f32 %v2468, %v2473
      %v2505 = vadd.f32 %v2469, %v2473
      %v2506 = vadd.f32 %v2470, %v2473
      %v2507 = vadd.f32 %v2475, %v226
      %v2508 = vadd.f32 %v2476, %v227
      %v2509 = vadd.f32 %v2477, %v228
      %v2510 = vadd.f32 %v2478, %v229
      %v2511 = vadd.f32 %v2479, %v230
      %v2512 = vadd.f32 %v2480, %v231
      %v2513 = vadd.f32 %v2481, %v232
      %v2514 = vadd.f32 %v2482, %v233
      %v2515 = vadd.f32 %v2483, %v234
      %v2516 = vadd.f32 %v2484, %v235
      %v2517 = vadd.f32 %v2485, %v236
      %v2518 = vadd.f32 %v2486, %v237
      %v2519 = vadd.f32 %v2487, %v238
      %v2520 = vadd.f32 %v2488, %v239
      %v2521 = vadd.f32 %v2489, %v240
      %v2522 = vadd.f32 %v2490, %v241
      %v2523 = vadd.f32 %v2491, %v242
      %v2524 = vadd.f32 %v2492, %v243
      %v2525 = vadd.f32 %v2493, %v244
      %v2526 = vadd.f32 %v2494, %v245
      %v2527 = vadd.f32 %v2495, %v246
      %v2528 = vadd.f32 %v2496, %v247
      %v2529 = vadd.f32 %v2497, %v248
      %v2530 = vadd.f32 %v2498, %v249
      %v2531 = vadd.f32 %v2499, %v250
      %v2532 = vadd.f32 %v2500, %v251
      %v2533 = vadd.f32 %v2501, %v252
      %v2534 = vadd.f32 %v2502, %v253
      %v2535 = vadd.f32 %v2503, %v254
      %v2536 = vadd.f32 %v2504, %v255
      %v2537 = vadd.f32 %v2505, %v256
      %v2538 = vadd.f32 %v2506, %v257
      %v2539 = vmax.f32 %v2507, 0.0
      %v2540 = vmax.f32 %v2508, 0.0
      %v2541 = vmax.f32 %v2509, 0.0
      %v2542 = vmax.f32 %v2510, 0.0
      %v2543 = vmax.f32 %v2511, 0.0
      %v2544 = vmax.f32 %v2512, 0.0
      %v2545 = vmax.f32 %v2513, 0.0
      %v2546 = vmax.f32 %v2514, 0.0
      %v2547 = vmax.f32 %v2515, 0.0
      %v2548 = vmax.f32 %v2516, 0.0
      %v2549 = vmax.f32 %v2517, 0.0
      %v2550 = vmax.f32 %v2518, 0.0
      %v2551 = vmax.f32 %v2519, 0.0
      %v2552 = vmax.f32 %v2520, 0.0
      %v2553 = vmax.f32 %v2521, 0.0
      %v2554 = vmax.f32 %v2522, 0.0
      %v2555 = vmax.f32 %v2523, 0.0
      %v2556 = vmax.f32 %v2524, 0.0
      %v2557 = vmax.f32 %v2525, 0.0
      %v2558 = vmax.f32 %v2526, 0.0
      %v2559 = vmax.f32 %v2527, 0.0
      %v2560 = vmax.f32 %v2528, 0.0
      %v2561 = vmax.f32 %v2529, 0.0
      %v2562 = vmax.f32 %v2530, 0.0
      %v2563 = vmax.f32 %v2531, 0.0
      %v2564 = vmax.f32 %v2532, 0.0
      %v2565 = vmax.f32 %v2533, 0.0
      %v2566 = vmax.f32 %v2534, 0.0
      %v2567 = vmax.f32 %v2535, 0.0
      %v2568 = vmax.f32 %v2536, 0.0
      %v2569 = vmax.f32 %v2537, 0.0
      %v2570 = vmax.f32 %v2538, 0.0
      %2571 = vst.msk [vmem:[%s224] sm:$0xff] %vm904, %v2539
      %2572 = vst.msk [vmem:[%s224 + $0x8] sm:$0xff] %vm904, %v2540
      %2573 = vst.msk [vmem:[%s224 + $0x10] sm:$0xff] %vm904, %v2541
      %2574 = vst.msk [vmem:[%s224 + $0x18] sm:$0xff] %vm904, %v2542
      %2575 = vst.msk [vmem:[%s224 + $0x20] sm:$0xff] %vm904, %v2543
      %2576 = vst.msk [vmem:[%s224 + $0x28] sm:$0xff] %vm904, %v2544
      %2577 = vst.msk [vmem:[%s224 + $0x30] sm:$0xff] %vm904, %v2545
      %2578 = vst.msk [vmem:[%s224 + $0x38] sm:$0xff] %vm904, %v2546
      %2579 = vst.msk [vmem:[%s224 + $0x40] sm:$0xff] %vm904, %v2547
      %2580 = vst.msk [vmem:[%s224 + $0x48] sm:$0xff] %vm904, %v2548
      %2581 = vst.msk [vmem:[%s224 + $0x50] sm:$0xff] %vm904, %v2549
      %2582 = vst.msk [vmem:[%s224 + $0x58] sm:$0xff] %vm904, %v2550
      %2583 = vst.msk [vmem:[%s224 + $0x60] sm:$0xff] %vm904, %v2551
      %2584 = vst.msk [vmem:[%s224 + $0x68] sm:$0xff] %vm904, %v2552
      %2585 = vst.msk [vmem:[%s224 + $0x70] sm:$0xff] %vm904, %v2553
      %2586 = vst.msk [vmem:[%s224 + $0x78] sm:$0xff] %vm904, %v2554
      %2587 = vst.msk [vmem:[%s224 + $0x80] sm:$0xff] %vm904, %v2555
      %2588 = vst.msk [vmem:[%s224 + $0x88] sm:$0xff] %vm904, %v2556
      %2589 = vst.msk [vmem:[%s224 + $0x90] sm:$0xff] %vm904, %v2557
      %2590 = vst.msk [vmem:[%s224 + $0x98] sm:$0xff] %vm904, %v2558
      %2591 = vst.msk [vmem:[%s224 + $0xa0] sm:$0xff] %vm904, %v2559
      %2592 = vst.msk [vmem:[%s224 + $0xa8] sm:$0xff] %vm904, %v2560
      %2593 = vst.msk [vmem:[%s224 + $0xb0] sm:$0xff] %vm904, %v2561
      %2594 = vst.msk [vmem:[%s224 + $0xb8] sm:$0xff] %vm904, %v2562
      %2595 = vst.msk [vmem:[%s224 + $0xc0] sm:$0xff] %vm904, %v2563
      %2596 = vst.msk [vmem:[%s224 + $0xc8] sm:$0xff] %vm904, %v2564
      %2597 = vst.msk [vmem:[%s224 + $0xd0] sm:$0xff] %vm904, %v2565
      %2598 = vst.msk [vmem:[%s224 + $0xd8] sm:$0xff] %vm904, %v2566
      %2599 = vst.msk [vmem:[%s224 + $0xe0] sm:$0xff] %vm904, %v2567
      %2600 = vst.msk [vmem:[%s224 + $0xe8] sm:$0xff] %vm904, %v2568
      %2601 = vst.msk [vmem:[%s224 + $0xf0] sm:$0xff] %vm904, %v2569
      %2602 = vst.msk [vmem:[%s224 + $0xf8] sm:$0xff] %vm904, %v2570
      %p2603 = scmp.lt.s32.totalorder %s16, 1
      %s2604 = scalar_select %p2603, %s16, 1
      %s2605 = smul.addr %s2604, 32
      %s2606 = smul.addr %s2605, 8
      %s2607 = scalar_lea.vmem %s5, %s2606
      // Predicated region
      $region41: #{tpu_custom_call.1} parent=39 // pred_check
        %p2608 = pneg %p144
      $region42: #{tpu_custom_call.1} parent=39 // pred_check_branch
        %2610 = sbr.rel (%p2608) target = $region44
      $region43: #{tpu_custom_call.1} parent=39 // pred_region
        _
      $region44: #{tpu_custom_call.1} parent=39 // pred_fallthru
        _
    $region40: #{tpu_custom_call.1} parent=5 // pred_fallthru
      _
    %p2611 = scmp.le.s32.totalorder 2, %s11
    // Predicated region
    $region45: #{tpu_custom_call.1} parent=5 // pred_check
      %p2612 = pneg %p2611
    $region46: #{tpu_custom_call.1} parent=5 // pred_check_branch
      %2614 = sbr.rel (%p2612) target = $region48
    $region47: #{tpu_custom_call.1} parent=5 // pred_region
      %s2615 = ssub.s32 %s11, 2
      // Predicated region
      $region49: #{tpu_custom_call.1} parent=47 // pred_check
        %p2616 = pneg %p150
      $region50: #{tpu_custom_call.1} parent=47 // pred_check_branch
        %2618 = sbr.rel (%p2616) target = $region52
      $region51: #{tpu_custom_call.1} parent=47 // pred_region
        %p2619 = scmp.lt.s32.totalorder %s17, 1
        %s2620 = scalar_select %p2619, %s17, 1
        %s2621 = smul.addr %s2620, 32
        %s2622 = smul.addr %s2621, 8
        %s2623 = scalar_lea.vmem %s5, %s2622
      $region52: #{tpu_custom_call.1} parent=47 // pred_fallthru
        _
    $region48: #{tpu_custom_call.1} parent=5 // pred_fallthru
      _
  $region6: #{tpu_custom_call.1} parent=0 // loop_footer
    %s15 = sadd.s32 1, %s11
  $region7: #{tpu_custom_call.1} parent=0 // loop_footer_branch
    %10 = sbr.rel target = $region3
  $region8: #{tpu_custom_call.1} parent=0 // loop_exit
    _

</llo_original>
